<compile_context>
chip_gen: v7x
topology: tpu7x:2x2x1
jax: 0.10.0
libtpu: 0.0.40
codegen_flags: <defaults>
</compile_context>

<pallas_src>
import functools

import jax
import jax.numpy as jnp
import numpy as np
from jax import lax
from jax.experimental import pallas as pl
from jax.experimental.pallas import tpu as pltpu

_GUARD = 8  # spare sublane rows at each end of the h1 scratch (only read at masked taps)


# ----------------------------- Pallas kernel -----------------------------

def _make_bottleneck_kernel(H, W, SH, has_proj):
    """Fused Bottleneck forward.  grid = (batch, row-strip of height SH)."""
    HW = H * W
    SHW = SH * W

    def kernel(x_ref, w1_ref, b1_ref, w2_ref, b2_ref, w3_ref, b3_ref, o_ref, h1p_ref):
        Cin = x_ref.shape[-1]
        P = w1_ref.shape[-1]
        Cout = o_ref.shape[-1]
        s = pl.program_id(1)

        # ---- once per batch element (strip 0): conv1(1x1)+BN1+ReLU over the whole
        #      image, stored into an H-padded VMEM scratch that persists across strips.
        #      Scratch rows: [_GUARD guard | W zeros | H*W image | W zeros | _GUARD guard]
        @pl.when(s == 0)
        def _():
            xb = x_ref[0].reshape(HW, Cin).astype(jnp.bfloat16)
            h1 = jnp.dot(xb, w1_ref[...], preferred_element_type=jnp.float32)
            h1 = jnp.maximum(h1 + b1_ref[...], 0.0)
            zrow = jnp.zeros((W, P), jnp.float32)
            h1p_ref[_GUARD:_GUARD + W, :] = zrow                     # top zero row
            h1p_ref[_GUARD + W:_GUARD + W + HW, :] = h1              # image rows
            h1p_ref[_GUARD + W + HW:_GUARD + 2 * W + HW, :] = zrow   # bottom zero row

        # ---- conv2 (3x3, pad=1, stride=1) on this strip: the 9 taps are dynamic-start
        #      slices of the padded scratch; only the two W-boundary taps need masking;
        #      then one im2col MXU matmul with K = 9P.
        base = pl.multiple_of(_GUARD + s * SHW, 8)
        w_idx = lax.broadcasted_iota(jnp.int32, (SHW, 1), 0) % W
        ok_left = w_idx >= 1           # (w - 1) inside the image
        ok_right = w_idx <= W - 2      # (w + 1) inside the image

        taps = []
        for dy in range(3):
            for dx in range(3):
                start = base + (dy * W + dx - 1)
                t = h1p_ref[pl.ds(start, SHW), :]                    # (SHW, P) f32
                if dx == 0:
                    t = jnp.where(ok_left, t, 0.0)
                elif dx == 2:
                    t = jnp.where(ok_right, t, 0.0)
                taps.append(t)
        patches = jnp.concatenate(taps, axis=-1).astype(jnp.bfloat16)  # (SHW, 9P)
        h2 = jnp.dot(patches, w2_ref[...], preferred_element_type=jnp.float32)
        h2 = jnp.maximum(h2 + b2_ref[...], 0.0)                        # (SHW, P) f32

        # ---- conv3 (1x1)+BN3, shortcut, final ReLU.
        row0 = pl.multiple_of(s * SH, SH)
        x_strip = x_ref[0, pl.ds(row0, SH), :, :].reshape(SHW, Cin)
        if has_proj:
            # projection shortcut fused into conv3:  [h2 | x] @ [w3 ; ws] + (b3 + bs)
            rhs = jnp.concatenate(
                [h2.astype(jnp.bfloat16), x_strip.astype(jnp.bfloat16)], axis=-1)
            y = jnp.dot(rhs, w3_ref[...], preferred_element_type=jnp.float32)
            out = jnp.maximum(y + b3_ref[...], 0.0)
        else:
            y = jnp.dot(h2.astype(jnp.bfloat16), w3_ref[...],
                        preferred_element_type=jnp.float32)
            out = jnp.maximum(y + b3_ref[...] + x_strip, 0.0)          # identity shortcut
        o_ref[0] = out.reshape(SH, W, Cout).astype(o_ref.dtype)

    return kernel


# ----------------------------- wrapper -----------------------------

def _fold_bn(w, bn, eps=1e-5):
    """Fold inference-mode BatchNorm into conv weights (out-channels on last axis)."""
    gamma, beta, mean, var = bn
    scale = gamma / jnp.sqrt(var + eps)
    return w * scale, beta - mean * scale


@functools.partial(jax.jit, static_argnames=("stride", "strip_h"))
def bottleneck_forward(x, params, stride=1, strip_h=None):
    """Fused Bottleneck forward.  `x` is NHWC (convert from PyTorch's NCHW once at the
    model boundary - a per-block transpose would re-read/write the tensor in HBM)."""
    if stride != 1:
        raise NotImplementedError("TODO(synk): stride != 1 (downsampling) not implemented")
    N, H, W, Cin = x.shape
    P = params["w1"].shape[-1]
    Cout = 4 * P
    has_proj = "ws" in params
    if not has_proj and Cin != Cout:
        raise ValueError("identity shortcut requires in_planes == expansion*planes")
    if W % 8 != 0:
        raise NotImplementedError("TODO(synk): W must be a multiple of 8 (sublane alignment)")

    if strip_h is None:
        strip_h = 8 if H % 8 == 0 else H      # more grid steps -> pipelined output DMA
    assert H % strip_h == 0
    S = H // strip_h

    # Fold BN into the convs; weights become bf16 MXU operands, biases stay f32.
    w1, b1 = _fold_bn(params["w1"], params["bn1"])             # (Cin, P)
    w2, b2 = _fold_bn(params["w2"], params["bn2"])             # (3,3,P,P) HWIO
    w2 = w2.reshape(9 * P, P)                                  # im2col tap-major layout
    w3, b3 = _fold_bn(params["w3"], params["bn3"])             # (P, Cout)
    if has_proj:
        ws, bs = _fold_bn(params["ws"], params["bns"])         # (Cin, Cout)
        w3 = jnp.concatenate([w3, ws], axis=0)                 # (P+Cin, Cout) fused shortcut
        b3 = b3 + bs
    K3 = w3.shape[0]
    w1 = w1.astype(jnp.bfloat16)
    w2 = w2.astype(jnp.bfloat16)
    w3 = w3.astype(jnp.bfloat16)
    b1 = b1.reshape(1, P).astype(jnp.float32)
    b2 = b2.reshape(1, P).astype(jnp.float32)
    b3 = b3.reshape(1, Cout).astype(jnp.float32)

    const = lambda n, s: (0, 0)
    grid_spec = pltpu.PrefetchScalarGridSpec(
        num_scalar_prefetch=0,
        grid=(N, S),
        in_specs=[
            # full image per batch element; block index constant over the strip axis,
            # so x is DMA'd from HBM once per batch element.
            pl.BlockSpec((1, H, W, Cin), lambda n, s: (n, 0, 0, 0)),
            pl.BlockSpec((Cin, P), const),
            pl.BlockSpec((1, P), const),
            pl.BlockSpec((9 * P, P), const),
            pl.BlockSpec((1, P), const),
            pl.BlockSpec((K3, Cout), const),
            pl.BlockSpec((1, Cout), const),
        ],
        out_specs=pl.BlockSpec((1, strip_h, W, Cout), lambda n, s: (n, s, 0, 0)),
        scratch_shapes=[pltpu.VMEM(((H + 2) * W + 2 * _GUARD, P), jnp.float32)],
    )
    return pl.pallas_call(
        _make_bottleneck_kernel(H, W, strip_h, has_proj),
        out_shape=jax.ShapeDtypeStruct((N, H, W, Cout), x.dtype),
        grid_spec=grid_spec,
        # Strip axis is "arbitrary": strips of one image reuse the h1 scratch computed
        # at strip 0 (batch axis stays "parallel" for megacore).
        compiler_params=pltpu.CompilerParams(
            dimension_semantics=("parallel", "arbitrary"),
            vmem_limit_bytes=32 * 1024 * 1024,
        ),
    )(x, w1, b1, w2, b2, w3, b3)


# ----------------------------- pure-JAX reference -----------------------------

def bottleneck_reference(x, params, stride=1, eps=1e-5):
    """NHWC reference with the module's exact (unfolded, f32) BatchNorm arithmetic."""
    def bn(v, p):
        gamma, beta, mean, var = p
        return (v - mean) * (gamma / jnp.sqrt(var + eps)) + beta

    h = jnp.einsum("nhwc,cp->nhwp", x, params["w1"])
    h = jax.nn.relu(bn(h, params["bn1"]))
    h = lax.conv_general_dilated(h, params["w2"], (stride, stride), ((1, 1), (1, 1)),
                                 dimension_numbers=("NHWC", "HWIO", "NHWC"))
    h = jax.nn.relu(bn(h, params["bn2"]))
    h = jnp.einsum("nhwp,pq->nhwq", h, params["w3"])
    h = bn(h, params["bn3"])
    if "ws" in params:
        sc = jnp.einsum("nhwc,cq->nhwq", x[:, ::stride, ::stride], params["ws"])
        sc = bn(sc, params["bns"])
    else:
        sc = x
    return jax.nn.relu(h + sc)


# ----------------------------- main -----------------------------

if __name__ == "__main__":
    key = jax.random.PRNGKey(0)

    def bn_params(k, c):
        k1, k2, k3, k4 = jax.random.split(k, 4)
        return (1.0 + 0.1 * jax.random.normal(k1, (c,), jnp.float32),    # gamma
                0.1 * jax.random.normal(k2, (c,), jnp.float32),          # beta
                0.1 * jax.random.normal(k3, (c,), jnp.float32),          # running mean
                jax.random.uniform(k4, (c,), jnp.float32, 0.5, 1.5))     # running var

    def make_params(k, cin, planes, with_proj):
        ks = jax.random.split(k, 8)
        p = {
            "w1": 0.1 * jax.random.normal(ks[0], (cin, planes), jnp.float32),
            "bn1": bn_params(ks[1], planes),
            "w2": 0.1 * jax.random.normal(ks[2], (3, 3, planes, planes), jnp.float32),
            "bn2": bn_params(ks[3], planes),
            "w3": 0.1 * jax.random.normal(ks[4], (planes, 4 * planes), jnp.float32),
            "bn3": bn_params(ks[5], 4 * planes),
        }
        if with_proj:
            p["ws"] = 0.1 * jax.random.normal(ks[6], (cin, 4 * planes), jnp.float32)
            p["bns"] = bn_params(ks[7], 4 * planes)
        return p

    N, H, W, planes = 2, 16, 16, 32
    k1, k2, k3, k4 = jax.random.split(key, 4)

    # Case 1: projection shortcut (in_planes != expansion*planes).
    params_p = make_params(k1, 64, planes, with_proj=True)
    x_p = jax.random.normal(k2, (N, H, W, 64), jnp.float32)              # NHWC
    out_p = jax.block_until_ready(bottleneck_forward(x_p, params_p))
    ref_p = bottleneck_reference(x_p, params_p)
    assert out_p.shape == (N, H, W, 4 * planes), out_p.shape
    np.testing.assert_allclose(np.asarray(out_p), np.asarray(ref_p), rtol=5e-2, atol=5e-2)

    # Case 2: identity shortcut (in_planes == expansion*planes).
    params_i = make_params(k3, 4 * planes, planes, with_proj=False)
    x_i = jax.random.normal(k4, (N, H, W, 4 * planes), jnp.float32)      # NHWC
    out_i = jax.block_until_ready(bottleneck_forward(x_i, params_i))
    ref_i = bottleneck_reference(x_i, params_i)
    assert out_i.shape == (N, H, W, 4 * planes), out_i.shape
    np.testing.assert_allclose(np.asarray(out_i), np.asarray(ref_i), rtol=5e-2, atol=5e-2)

    print("KERNEL_OK")
</pallas_src>

<mosaic_0001>
module attributes {stable_mosaic.version = 11 : i64} {
  func.func @kernel(%arg0: i32, %arg1: i32, %arg2: memref<1x16x16x64xf32, #tpu.memory_space<vmem>>, %arg3: memref<64x32xbf16, #tpu.memory_space<vmem>>, %arg4: memref<1x32xf32, #tpu.memory_space<vmem>>, %arg5: memref<288x32xbf16, #tpu.memory_space<vmem>>, %arg6: memref<1x32xf32, #tpu.memory_space<vmem>>, %arg7: memref<96x128xbf16, #tpu.memory_space<vmem>>, %arg8: memref<1x128xf32, #tpu.memory_space<vmem>>, %arg9: memref<1x8x16x128xf32, #tpu.memory_space<vmem>>, %arg10: memref<304x32xf32, #tpu.memory_space<vmem>>) attributes {dimension_semantics = [#tpu.dimension_semantics<parallel>, #tpu.dimension_semantics<arbitrary>], iteration_bounds = array<i64: 2, 2>, scalar_prefetch = 0 : i64, scratch_operands = 1 : i64, tpu.core_type = #tpu.core_type<tc>, window_params = [{transform_indices = @transform_0, window_bounds = array<i64: 1, 16, 16, 64>}, {pipeline_mode = #tpu.pipeline_mode<synchronous>, transform_indices = @transform_1, window_bounds = array<i64: 64, 32>}, {pipeline_mode = #tpu.pipeline_mode<synchronous>, transform_indices = @transform_2, window_bounds = array<i64: 1, 32>}, {pipeline_mode = #tpu.pipeline_mode<synchronous>, transform_indices = @transform_3, window_bounds = array<i64: 288, 32>}, {pipeline_mode = #tpu.pipeline_mode<synchronous>, transform_indices = @transform_4, window_bounds = array<i64: 1, 32>}, {pipeline_mode = #tpu.pipeline_mode<synchronous>, transform_indices = @transform_5, window_bounds = array<i64: 96, 128>}, {pipeline_mode = #tpu.pipeline_mode<synchronous>, transform_indices = @transform_6, window_bounds = array<i64: 1, 128>}, {transform_indices = @transform_7, window_bounds = array<i64: 1, 8, 16, 128>}]} {
    %c0_i32 = arith.constant 0 : i32
    %0 = arith.cmpi eq, %arg1, %c0_i32 : i32
    %1 = arith.extui %0 : i1 to i32
    %c0_i32_0 = arith.constant 0 : i32
    %2 = arith.cmpi ne, %1, %c0_i32_0 : i32
    scf.if %2 {
      %c0_42 = arith.constant 0 : index
      %c0_43 = arith.constant 0 : index
      %c0_44 = arith.constant 0 : index
      %c0_45 = arith.constant 0 : index
      %107 = vector.load %arg2[%c0_42, %c0_43, %c0_44, %c0_45] : memref<1x16x16x64xf32, #tpu.memory_space<vmem>>, vector<1x16x16x64xf32>
      %108 = vector.shape_cast %107 : vector<1x16x16x64xf32> to vector<16x16x64xf32>
      %109 = vector.shape_cast %108 : vector<16x16x64xf32> to vector<256x64xf32>
      %110 = arith.truncf %109 : vector<256x64xf32> to vector<256x64xbf16>
      %c0_46 = arith.constant 0 : index
      %c0_47 = arith.constant 0 : index
      %111 = vector.load %arg3[%c0_46, %c0_47] : memref<64x32xbf16, #tpu.memory_space<vmem>>, vector<64x32xbf16>
      %cst_48 = arith.constant dense<0.000000e+00> : vector<256x32xf32>
      %112 = tpu.matmul %110, %111, %cst_48 {dimension_numbers = #tpu.dot_dimension_numbers<[1], [0], [0], [1], [0, 0, 1, 1], [], []>} : vector<256x64xbf16>, vector<64x32xbf16>, vector<256x32xf32> -> vector<256x32xf32>
      %c0_49 = arith.constant 0 : index
      %c0_50 = arith.constant 0 : index
      %113 = vector.load %arg4[%c0_49, %c0_50] : memref<1x32xf32, #tpu.memory_space<vmem>>, vector<1x32xf32>
      %114 = vector.broadcast %113 : vector<1x32xf32> to vector<256x32xf32>
      %115 = arith.addf %112, %114 : vector<256x32xf32>
      %cst_51 = arith.constant 0.000000e+00 : f32
      %116 = vector.broadcast %cst_51 : f32 to vector<256x32xf32>
      %117 = arith.maximumf %115, %116 : vector<256x32xf32>
      %cst_52 = arith.constant 0.000000e+00 : f32
      %118 = vector.broadcast %cst_52 : f32 to vector<16x32xf32>
      %c8 = arith.constant 8 : index
      %c0_53 = arith.constant 0 : index
      %119 = vector.load %arg10[%c8, %c0_53] : memref<304x32xf32, #tpu.memory_space<vmem>>, vector<16x32xf32>
      tpu.vector_store %arg10[%c8, %c0_53], %118 {strides = array<i32>} : memref<304x32xf32, #tpu.memory_space<vmem>>, vector<16x32xf32>,
      %c24 = arith.constant 24 : index
      %c0_54 = arith.constant 0 : index
      %120 = vector.load %arg10[%c24, %c0_54] : memref<304x32xf32, #tpu.memory_space<vmem>>, vector<256x32xf32>
      tpu.vector_store %arg10[%c24, %c0_54], %117 {strides = array<i32>} : memref<304x32xf32, #tpu.memory_space<vmem>>, vector<256x32xf32>,
      %c280 = arith.constant 280 : index
      %c0_55 = arith.constant 0 : index
      %121 = vector.load %arg10[%c280, %c0_55] : memref<304x32xf32, #tpu.memory_space<vmem>>, vector<16x32xf32>
      tpu.vector_store %arg10[%c280, %c0_55], %118 {strides = array<i32>} : memref<304x32xf32, #tpu.memory_space<vmem>>, vector<16x32xf32>,
    } else {
    }
    %c128_i32 = arith.constant 128 : i32
    %3 = arith.muli %arg1, %c128_i32 : i32
    %c8_i32 = arith.constant 8 : i32
    %4 = arith.addi %c8_i32, %3 : i32
    %5 = tpu.assume_multiple %4, 8 : i32
    %6 = tpu.iota {dimensions = array<i32: 0>} : vector<128x1xi32>
    %c16_i32 = arith.constant 16 : i32
    %c0_i32_1 = arith.constant 0 : i32
    %7 = arith.cmpi eq, %c16_i32, %c0_i32_1 : i32
    %c1_i32 = arith.constant 1 : i32
    %8 = arith.select %7, %c1_i32, %c16_i32 : i32
    %9 = vector.broadcast %8 : i32 to vector<128x1xi32>
    %10 = arith.remsi %6, %9 : vector<128x1xi32>
    %c0_i32_2 = arith.constant 0 : i32
    %11 = vector.broadcast %c0_i32_2 : i32 to vector<128x1xi32>
    %12 = arith.cmpi ne, %10, %11 : vector<128x1xi32>
    %c0_i32_3 = arith.constant 0 : i32
    %13 = vector.broadcast %c0_i32_3 : i32 to vector<128x1xi32>
    %14 = arith.cmpi slt, %10, %13 : vector<128x1xi32>
    %c0_i32_4 = arith.constant 0 : i32
    %15 = arith.cmpi slt, %8, %c0_i32_4 : i32
    %16 = vector.broadcast %15 : i1 to vector<128x1xi1>
    %17 = vector.broadcast %16 : vector<128x1xi1> to vector<128x1xi1>
    %18 = arith.xori %14, %17 : vector<128x1xi1>
    %19 = arith.andi %18, %12 : vector<128x1xi1>
    %20 = vector.broadcast %8 : i32 to vector<128x1xi32>
    %21 = arith.addi %10, %20 : vector<128x1xi32>
    %22 = arith.select %19, %21, %10 : vector<128x1xi1>, vector<128x1xi32>
    %c1_i32_5 = arith.constant 1 : i32
    %23 = vector.broadcast %c1_i32_5 : i32 to vector<128x1xi32>
    %24 = arith.cmpi sge, %22, %23 : vector<128x1xi32>
    %c14_i32 = arith.constant 14 : i32
    %25 = vector.broadcast %c14_i32 : i32 to vector<128x1xi32>
    %26 = arith.cmpi sle, %22, %25 : vector<128x1xi32>
    %c-1_i32 = arith.constant -1 : i32
    %27 = arith.addi %5, %c-1_i32 : i32
    %28 = arith.index_cast %27 : i32 to index
    %c0 = arith.constant 0 : index
    %29 = vector.load %arg10[%28, %c0] : memref<304x32xf32, #tpu.memory_space<vmem>>, vector<128x32xf32>
    %cst = arith.constant 0.000000e+00 : f32
    %30 = vector.shape_cast %24 : vector<128x1xi1> to vector<128x1xi1>
    %31 = vector.broadcast %30 : vector<128x1xi1> to vector<128x32xi1>
    %32 = vector.broadcast %cst : f32 to vector<128x32xf32>
    %33 = arith.select %31, %29, %32 : vector<128x32xi1>, vector<128x32xf32>
    %c0_i32_6 = arith.constant 0 : i32
    %34 = arith.addi %5, %c0_i32_6 : i32
    %35 = arith.index_cast %34 : i32 to index
    %c0_7 = arith.constant 0 : index
    %36 = vector.load %arg10[%35, %c0_7] : memref<304x32xf32, #tpu.memory_space<vmem>>, vector<128x32xf32>
    %c1_i32_8 = arith.constant 1 : i32
    %37 = arith.addi %5, %c1_i32_8 : i32
    %38 = arith.index_cast %37 : i32 to index
    %c0_9 = arith.constant 0 : index
    %39 = vector.load %arg10[%38, %c0_9] : memref<304x32xf32, #tpu.memory_space<vmem>>, vector<128x32xf32>
    %cst_10 = arith.constant 0.000000e+00 : f32
    %40 = vector.shape_cast %26 : vector<128x1xi1> to vector<128x1xi1>
    %41 = vector.broadcast %40 : vector<128x1xi1> to vector<128x32xi1>
    %42 = vector.broadcast %cst_10 : f32 to vector<128x32xf32>
    %43 = arith.select %41, %39, %42 : vector<128x32xi1>, vector<128x32xf32>
    %c15_i32 = arith.constant 15 : i32
    %44 = arith.addi %5, %c15_i32 : i32
    %45 = arith.index_cast %44 : i32 to index
    %c0_11 = arith.constant 0 : index
    %46 = vector.load %arg10[%45, %c0_11] : memref<304x32xf32, #tpu.memory_space<vmem>>, vector<128x32xf32>
    %cst_12 = arith.constant 0.000000e+00 : f32
    %47 = vector.shape_cast %24 : vector<128x1xi1> to vector<128x1xi1>
    %48 = vector.broadcast %47 : vector<128x1xi1> to vector<128x32xi1>
    %49 = vector.broadcast %cst_12 : f32 to vector<128x32xf32>
    %50 = arith.select %48, %46, %49 : vector<128x32xi1>, vector<128x32xf32>
    %c16_i32_13 = arith.constant 16 : i32
    %51 = arith.addi %5, %c16_i32_13 : i32
    %52 = arith.index_cast %51 : i32 to index
    %c0_14 = arith.constant 0 : index
    %53 = vector.load %arg10[%52, %c0_14] : memref<304x32xf32, #tpu.memory_space<vmem>>, vector<128x32xf32>
    %c17_i32 = arith.constant 17 : i32
    %54 = arith.addi %5, %c17_i32 : i32
    %55 = arith.index_cast %54 : i32 to index
    %c0_15 = arith.constant 0 : index
    %56 = vector.load %arg10[%55, %c0_15] : memref<304x32xf32, #tpu.memory_space<vmem>>, vector<128x32xf32>
    %cst_16 = arith.constant 0.000000e+00 : f32
    %57 = vector.shape_cast %26 : vector<128x1xi1> to vector<128x1xi1>
    %58 = vector.broadcast %57 : vector<128x1xi1> to vector<128x32xi1>
    %59 = vector.broadcast %cst_16 : f32 to vector<128x32xf32>
    %60 = arith.select %58, %56, %59 : vector<128x32xi1>, vector<128x32xf32>
    %c31_i32 = arith.constant 31 : i32
    %61 = arith.addi %5, %c31_i32 : i32
    %62 = arith.index_cast %61 : i32 to index
    %c0_17 = arith.constant 0 : index
    %63 = vector.load %arg10[%62, %c0_17] : memref<304x32xf32, #tpu.memory_space<vmem>>, vector<128x32xf32>
    %cst_18 = arith.constant 0.000000e+00 : f32
    %64 = vector.shape_cast %24 : vector<128x1xi1> to vector<128x1xi1>
    %65 = vector.broadcast %64 : vector<128x1xi1> to vector<128x32xi1>
    %66 = vector.broadcast %cst_18 : f32 to vector<128x32xf32>
    %67 = arith.select %65, %63, %66 : vector<128x32xi1>, vector<128x32xf32>
    %c32_i32 = arith.constant 32 : i32
    %68 = arith.addi %5, %c32_i32 : i32
    %69 = arith.index_cast %68 : i32 to index
    %c0_19 = arith.constant 0 : index
    %70 = vector.load %arg10[%69, %c0_19] : memref<304x32xf32, #tpu.memory_space<vmem>>, vector<128x32xf32>
    %c33_i32 = arith.constant 33 : i32
    %71 = arith.addi %5, %c33_i32 : i32
    %72 = arith.index_cast %71 : i32 to index
    %c0_20 = arith.constant 0 : index
    %73 = vector.load %arg10[%72, %c0_20] : memref<304x32xf32, #tpu.memory_space<vmem>>, vector<128x32xf32>
    %cst_21 = arith.constant 0.000000e+00 : f32
    %74 = vector.shape_cast %26 : vector<128x1xi1> to vector<128x1xi1>
    %75 = vector.broadcast %74 : vector<128x1xi1> to vector<128x32xi1>
    %76 = vector.broadcast %cst_21 : f32 to vector<128x32xf32>
    %77 = arith.select %75, %73, %76 : vector<128x32xi1>, vector<128x32xf32>
    %78 = tpu.concatenate %33, %36, %43, %50, %53, %60, %67, %70, %77 in 1 : vector<128x32xf32>, vector<128x32xf32>, vector<128x32xf32>, vector<128x32xf32>, vector<128x32xf32>, vector<128x32xf32>, vector<128x32xf32>, vector<128x32xf32>, vector<128x32xf32> -> vector<128x288xf32>
    %79 = arith.truncf %78 : vector<128x288xf32> to vector<128x288xbf16>
    %c0_22 = arith.constant 0 : index
    %c0_23 = arith.constant 0 : index
    %80 = vector.load %arg5[%c0_22, %c0_23] : memref<288x32xbf16, #tpu.memory_space<vmem>>, vector<288x32xbf16>
    %cst_24 = arith.constant dense<0.000000e+00> : vector<128x32xf32>
    %81 = tpu.matmul %79, %80, %cst_24 {dimension_numbers = #tpu.dot_dimension_numbers<[1], [0], [0], [1], [0, 0, 1, 1], [], []>} : vector<128x288xbf16>, vector<288x32xbf16>, vector<128x32xf32> -> vector<128x32xf32>
    %c0_25 = arith.constant 0 : index
    %c0_26 = arith.constant 0 : index
    %82 = vector.load %arg6[%c0_25, %c0_26] : memref<1x32xf32, #tpu.memory_space<vmem>>, vector<1x32xf32>
    %83 = vector.broadcast %82 : vector<1x32xf32> to vector<128x32xf32>
    %84 = arith.addf %81, %83 : vector<128x32xf32>
    %cst_27 = arith.constant 0.000000e+00 : f32
    %85 = vector.broadcast %cst_27 : f32 to vector<128x32xf32>
    %86 = arith.maximumf %84, %85 : vector<128x32xf32>
    %c8_i32_28 = arith.constant 8 : i32
    %87 = arith.muli %arg1, %c8_i32_28 : i32
    %88 = tpu.assume_multiple %87, 8 : i32
    %c0_29 = arith.constant 0 : index
    %89 = arith.index_cast %88 : i32 to index
    %c0_30 = arith.constant 0 : index
    %c0_31 = arith.constant 0 : index
    %90 = vector.load %arg2[%c0_29, %89, %c0_30, %c0_31] : memref<1x16x16x64xf32, #tpu.memory_space<vmem>>, vector<1x8x16x64xf32>
    %91 = vector.shape_cast %90 : vector<1x8x16x64xf32> to vector<8x16x64xf32>
    %92 = vector.shape_cast %91 : vector<8x16x64xf32> to vector<128x64xf32>
    %93 = arith.truncf %86 : vector<128x32xf32> to vector<128x32xbf16>
    %94 = arith.truncf %92 : vector<128x64xf32> to vector<128x64xbf16>
    %95 = tpu.concatenate %93, %94 in 1 : vector<128x32xbf16>, vector<128x64xbf16> -> vector<128x96xbf16>
    %c0_32 = arith.constant 0 : index
    %c0_33 = arith.constant 0 : index
    %96 = vector.load %arg7[%c0_32, %c0_33] : memref<96x128xbf16, #tpu.memory_space<vmem>>, vector<96x128xbf16>
    %cst_34 = arith.constant dense<0.000000e+00> : vector<128x128xf32>
    %97 = tpu.matmul %95, %96, %cst_34 {dimension_numbers = #tpu.dot_dimension_numbers<[1], [0], [0], [1], [0, 0, 1, 1], [], []>} : vector<128x96xbf16>, vector<96x128xbf16>, vector<128x128xf32> -> vector<128x128xf32>
    %c0_35 = arith.constant 0 : index
    %c0_36 = arith.constant 0 : index
    %98 = vector.load %arg8[%c0_35, %c0_36] : memref<1x128xf32, #tpu.memory_space<vmem>>, vector<1x128xf32>
    %99 = vector.broadcast %98 : vector<1x128xf32> to vector<128x128xf32>
    %100 = arith.addf %97, %99 : vector<128x128xf32>
    %cst_37 = arith.constant 0.000000e+00 : f32
    %101 = vector.broadcast %cst_37 : f32 to vector<128x128xf32>
    %102 = arith.maximumf %100, %101 : vector<128x128xf32>
    %103 = vector.shape_cast %102 : vector<128x128xf32> to vector<8x16x128xf32>
    %c0_38 = arith.constant 0 : index
    %c0_39 = arith.constant 0 : index
    %c0_40 = arith.constant 0 : index
    %c0_41 = arith.constant 0 : index
    %104 = vector.load %arg9[%c0_38, %c0_39, %c0_40, %c0_41] : memref<1x8x16x128xf32, #tpu.memory_space<vmem>>, vector<1x8x16x128xf32>
    %105 = vector.shape_cast %104 : vector<1x8x16x128xf32> to vector<8x16x128xf32>
    %106 = vector.shape_cast %103 : vector<8x16x128xf32> to vector<1x8x16x128xf32>
    tpu.vector_store %arg9[%c0_38, %c0_39, %c0_40, %c0_41], %106 {strides = array<i32>} : memref<1x8x16x128xf32, #tpu.memory_space<vmem>>, vector<1x8x16x128xf32>,
    return
  }
  func.func @transform_0(%arg0: i32, %arg1: i32) -> (i32, i32, i32, i32) {
    %c0_i32 = arith.constant 0 : i32
    %c0_i32_0 = arith.constant 0 : i32
    %c0_i32_1 = arith.constant 0 : i32
    %c0_i32_2 = arith.constant 0 : i32
    return %arg0, %c0_i32, %c0_i32_0, %c0_i32_1 : i32, i32, i32, i32
  }
  func.func @transform_1(%arg0: i32, %arg1: i32) -> (i32, i32) {
    %c0_i32 = arith.constant 0 : i32
    %c0_i32_0 = arith.constant 0 : i32
    %c0_i32_1 = arith.constant 0 : i32
    return %c0_i32, %c0_i32_0 : i32, i32
  }
  func.func @transform_2(%arg0: i32, %arg1: i32) -> (i32, i32) {
    %c0_i32 = arith.constant 0 : i32
    %c0_i32_0 = arith.constant 0 : i32
    %c0_i32_1 = arith.constant 0 : i32
    return %c0_i32, %c0_i32_0 : i32, i32
  }
  func.func @transform_3(%arg0: i32, %arg1: i32) -> (i32, i32) {
    %c0_i32 = arith.constant 0 : i32
    %c0_i32_0 = arith.constant 0 : i32
    %c0_i32_1 = arith.constant 0 : i32
    return %c0_i32, %c0_i32_0 : i32, i32
  }
  func.func @transform_4(%arg0: i32, %arg1: i32) -> (i32, i32) {
    %c0_i32 = arith.constant 0 : i32
    %c0_i32_0 = arith.constant 0 : i32
    %c0_i32_1 = arith.constant 0 : i32
    return %c0_i32, %c0_i32_0 : i32, i32
  }
  func.func @transform_5(%arg0: i32, %arg1: i32) -> (i32, i32) {
    %c0_i32 = arith.constant 0 : i32
    %c0_i32_0 = arith.constant 0 : i32
    %c0_i32_1 = arith.constant 0 : i32
    return %c0_i32, %c0_i32_0 : i32, i32
  }
  func.func @transform_6(%arg0: i32, %arg1: i32) -> (i32, i32) {
    %c0_i32 = arith.constant 0 : i32
    %c0_i32_0 = arith.constant 0 : i32
    %c0_i32_1 = arith.constant 0 : i32
    return %c0_i32, %c0_i32_0 : i32, i32
  }
  func.func @transform_7(%arg0: i32, %arg1: i32) -> (i32, i32, i32, i32) {
    %c0_i32 = arith.constant 0 : i32
    %c0_i32_0 = arith.constant 0 : i32
    %c0_i32_1 = arith.constant 0 : i32
    return %arg0, %arg1, %c0_i32, %c0_i32_0 : i32, i32, i32, i32
  }
}

</mosaic_0001>

<llo_original>
// kernel: bottleneck_forward.1
$region0: #{bottleneck_forward.1}
  #allocation0 [shape = 'u32[]', space=smem, size = 0x4, offset = 0x4, fixed_abs, tag = 'smem constant byte address 0x4 - core index']
  #allocation1 [shape = 'u32[144,128]{1,0:T(1,128)}', space=vmem, size = 0x12000, scoped, tag = 'internal scratch']
  #allocation2 [shape = 'f32[304,32]{1,0:T(8,128)}', space=vmem, size = 0x26000, scoped, tag = 'scratch operand']
  %s0 = inlined_call_operand.vmem [shape: f32[2,16,16,64], index: 0, kind: input, shape index: {}]
  %s1 = inlined_call_operand.vmem [shape: bf16[64,32], index: 1, kind: input, shape index: {}]
  %s2 = inlined_call_operand.vmem [shape: f32[1,32], index: 2, kind: input, shape index: {}]
  %s3 = inlined_call_operand.vmem [shape: bf16[288,32], index: 3, kind: input, shape index: {}]
  %s4 = inlined_call_operand.vmem [shape: f32[1,32], index: 4, kind: input, shape index: {}]
  %s5 = inlined_call_operand.vmem [shape: bf16[96,128], index: 5, kind: input, shape index: {}]
  %s6 = inlined_call_operand.vmem [shape: f32[1,128], index: 6, kind: input, shape index: {}]
  %s7 = inlined_call_operand.hbm [shape: f32[2,16,16,128], index: 7, kind: output, shape index: {}]
  %s8 = sld [smem:[#allocation0]]
  $region65: #{bottleneck_forward.1} parent=0
    _
  %s10 = ssub.s32 1, %s8
  %s11 = scalar_select 0, %s10, %s8
  $region1: #{bottleneck_forward.1} parent=0
    #allocation3 [shape = 'u8[131072]{0}', space=vmem, size = 0x20000, scoped, tag = 'output window, operand 0']
    #allocation4 [shape = 's32[2]{0}', space=sflag, size = 0x8, scoped, tag = 'scoped memory for bottleneck_forward.1']
    %12 = vsyncpa [#allocation4], 0
    %s13 = scalar_lea.sflag [#allocation4], 1
    %14 = vsyncpa %s13, 0
    loop: start=0, step=1, limit=6
    $region2: #{bottleneck_forward.1} parent=1 // loop_pre_header
      _
    $region3: #{bottleneck_forward.1} parent=1 // loop_header
      %s16 = sphi 0, %s20
      %p17 = scmp.ge.s32.totalorder %s16, 6
      %s23 = sphi 0, %s35
      %s24 = sphi 0, %s31
      %s25 = sphi 0, %s23
      %s26 = sphi 0, %s24
      %s27 = sphi 0, %s25
      %s28 = sphi 0, %s26
      %s38 = sphi 0, %s40
      %s41 = sphi 0, %s38
      %s42 = sphi 0, %s41
      %s58 = sphi 0, %s42
      %s62 = sphi 0, %s62
      %s64 = sphi 0, %s62
      %s65 = sphi 0, %s64
      %s79 = sphi 0, %s65
      %s83 = sphi 0, %s83
      %s85 = sphi 0, %s83
      %s86 = sphi 0, %s85
      %s100 = sphi 0, %s86
      %s104 = sphi 0, %s104
      %s106 = sphi 0, %s104
      %s107 = sphi 0, %s106
      %s121 = sphi 0, %s107
      %s125 = sphi 0, %s125
      %s127 = sphi 0, %s125
      %s128 = sphi 0, %s127
      %s142 = sphi 0, %s128
      %s146 = sphi 0, %s146
      %s148 = sphi 0, %s146
      %s149 = sphi 0, %s148
      %s163 = sphi 0, %s149
      %s167 = sphi 0, %s167
      %s169 = sphi 0, %s167
      %s170 = sphi 0, %s169
      %s184 = sphi 0, %s170
      %s192 = sphi 0, %s194
      %s195 = sphi 0, %s192
      %s196 = sphi 0, %s195
      %s212 = sphi 0, %s196
    $region4: #{bottleneck_forward.1} parent=1 // loop_header_branch
      %19 = sbr.rel (%p17) target = $region8
    $region5: #{bottleneck_forward.1} parent=1 // loop_body
      %s21 = ssub.s32 %s16, 1
      %s22 = ssub.s32 %s16, 2
      %s29 = sadd.s32 1, %s24
      %p30 = scmp.ge.s32.totalorder %s29, 2
      %s31 = scalar_select %p30, 0, %s29
      %s32 = sadd.s32 1, %s23
      %s33 = scalar_select %p30, %s32, %s23
      %p34 = scmp.ge.s32.totalorder %s33, 2
      %s35 = scalar_select %p34, 0, %s33
      %s36 = ssub.s32 %s23, %s35
      %p37 = scmp.eq.s32.totalorder %s36, 0
      %s39 = sadd.s32 %s38, 1
      %s40 = scalar_select %p37, %s38, %s39
      %p43 = pneg %p37
      %p44 = scmp.eq.s32.totalorder %s16, 3
      %p45 = por %p43, %p44
      %p46 = scmp.ne.s32.totalorder %s38, %s41
      %p47 = scmp.eq.s32.totalorder %s16, 0
      %p48 = por %p46, %p47
      %p49 = scmp.ne.s32.totalorder %s38, %s41
      %p50 = scmp.eq.s32.totalorder %s21, 3
      %p51 = por %p49, %p50
      %p52 = scmp.ne.s32.totalorder %s41, %s42
      %p53 = scmp.eq.s32.totalorder %s21, 0
      %p54 = por %p52, %p53
      %p55 = scmp.ne.s32.totalorder %s41, %s42
      %p56 = scmp.eq.s32.totalorder %s22, 3
      %p57 = por %p55, %p56
      %p59 = scmp.ne.s32.totalorder %s42, %s58
      %p60 = scmp.eq.s32.totalorder %s22, 0
      %p61 = por %p59, %p60
      %s63 = sadd.s32 %s62, 1
      %p66 = scmp.eq.s32.totalorder %s16, 3
      %p67 = scmp.ne.s32.totalorder %s62, %s64
      %p68 = scmp.eq.s32.totalorder %s16, 0
      %p69 = por %p67, %p68
      %p70 = scmp.ne.s32.totalorder %s62, %s64
      %p71 = scmp.eq.s32.totalorder %s21, 3
      %p72 = por %p70, %p71
      %p73 = scmp.ne.s32.totalorder %s64, %s65
      %p74 = scmp.eq.s32.totalorder %s21, 0
      %p75 = por %p73, %p74
      %p76 = scmp.ne.s32.totalorder %s64, %s65
      %p77 = scmp.eq.s32.totalorder %s22, 3
      %p78 = por %p76, %p77
      %p80 = scmp.ne.s32.totalorder %s65, %s79
      %p81 = scmp.eq.s32.totalorder %s22, 0
      %p82 = por %p80, %p81
      %s84 = sadd.s32 %s83, 1
      %p87 = scmp.eq.s32.totalorder %s16, 3
      %p88 = scmp.ne.s32.totalorder %s83, %s85
      %p89 = scmp.eq.s32.totalorder %s16, 0
      %p90 = por %p88, %p89
      %p91 = scmp.ne.s32.totalorder %s83, %s85
      %p92 = scmp.eq.s32.totalorder %s21, 3
      %p93 = por %p91, %p92
      %p94 = scmp.ne.s32.totalorder %s85, %s86
      %p95 = scmp.eq.s32.totalorder %s21, 0
      %p96 = por %p94, %p95
      %p97 = scmp.ne.s32.totalorder %s85, %s86
      %p98 = scmp.eq.s32.totalorder %s22, 3
      %p99 = por %p97, %p98
      %p101 = scmp.ne.s32.totalorder %s86, %s100
      %p102 = scmp.eq.s32.totalorder %s22, 0
      %p103 = por %p101, %p102
      %s105 = sadd.s32 %s104, 1
      %p108 = scmp.eq.s32.totalorder %s16, 3
      %p109 = scmp.ne.s32.totalorder %s104, %s106
      %p110 = scmp.eq.s32.totalorder %s16, 0
      %p111 = por %p109, %p110
      %p112 = scmp.ne.s32.totalorder %s104, %s106
      %p113 = scmp.eq.s32.totalorder %s21, 3
      %p114 = por %p112, %p113
      %p115 = scmp.ne.s32.totalorder %s106, %s107
      %p116 = scmp.eq.s32.totalorder %s21, 0
      %p117 = por %p115, %p116
      %p118 = scmp.ne.s32.totalorder %s106, %s107
      %p119 = scmp.eq.s32.totalorder %s22, 3
      %p120 = por %p118, %p119
      %p122 = scmp.ne.s32.totalorder %s107, %s121
      %p123 = scmp.eq.s32.totalorder %s22, 0
      %p124 = por %p122, %p123
      %s126 = sadd.s32 %s125, 1
      %p129 = scmp.eq.s32.totalorder %s16, 3
      %p130 = scmp.ne.s32.totalorder %s125, %s127
      %p131 = scmp.eq.s32.totalorder %s16, 0
      %p132 = por %p130, %p131
      %p133 = scmp.ne.s32.totalorder %s125, %s127
      %p134 = scmp.eq.s32.totalorder %s21, 3
      %p135 = por %p133, %p134
      %p136 = scmp.ne.s32.totalorder %s127, %s128
      %p137 = scmp.eq.s32.totalorder %s21, 0
      %p138 = por %p136, %p137
      %p139 = scmp.ne.s32.totalorder %s127, %s128
      %p140 = scmp.eq.s32.totalorder %s22, 3
      %p141 = por %p139, %p140
      %p143 = scmp.ne.s32.totalorder %s128, %s142
      %p144 = scmp.eq.s32.totalorder %s22, 0
      %p145 = por %p143, %p144
      %s147 = sadd.s32 %s146, 1
      %p150 = scmp.eq.s32.totalorder %s16, 3
      %p151 = scmp.ne.s32.totalorder %s146, %s148
      %p152 = scmp.eq.s32.totalorder %s16, 0
      %p153 = por %p151, %p152
      %p154 = scmp.ne.s32.totalorder %s146, %s148
      %p155 = scmp.eq.s32.totalorder %s21, 3
      %p156 = por %p154, %p155
      %p157 = scmp.ne.s32.totalorder %s148, %s149
      %p158 = scmp.eq.s32.totalorder %s21, 0
      %p159 = por %p157, %p158
      %p160 = scmp.ne.s32.totalorder %s148, %s149
      %p161 = scmp.eq.s32.totalorder %s22, 3
      %p162 = por %p160, %p161
      %p164 = scmp.ne.s32.totalorder %s149, %s163
      %p165 = scmp.eq.s32.totalorder %s22, 0
      %p166 = por %p164, %p165
      %s168 = sadd.s32 %s167, 1
      %p171 = scmp.eq.s32.totalorder %s16, 3
      %p172 = scmp.ne.s32.totalorder %s167, %s169
      %p173 = scmp.eq.s32.totalorder %s16, 0
      %p174 = por %p172, %p173
      %p175 = scmp.ne.s32.totalorder %s167, %s169
      %p176 = scmp.eq.s32.totalorder %s21, 3
      %p177 = por %p175, %p176
      %p178 = scmp.ne.s32.totalorder %s169, %s170
      %p179 = scmp.eq.s32.totalorder %s21, 0
      %p180 = por %p178, %p179
      %p181 = scmp.ne.s32.totalorder %s169, %s170
      %p182 = scmp.eq.s32.totalorder %s22, 3
      %p183 = por %p181, %p182
      %p185 = scmp.ne.s32.totalorder %s170, %s184
      %p186 = scmp.eq.s32.totalorder %s22, 0
      %p187 = por %p185, %p186
      %s188 = ssub.s32 %s23, %s35
      %s189 = ssub.s32 %s24, %s31
      %s190 = sor.u32 %s188, %s189
      %p191 = scmp.eq.s32.totalorder %s190, 0
      %s193 = sadd.s32 %s192, 1
      %s194 = scalar_select %p191, %s192, %s193
      %p197 = pneg %p191
      %p198 = scmp.eq.s32.totalorder %s16, 3
      %p199 = por %p197, %p198
      %p200 = scmp.ne.s32.totalorder %s192, %s195
      %p201 = scmp.eq.s32.totalorder %s16, 0
      %p202 = por %p200, %p201
      %p203 = scmp.ne.s32.totalorder %s192, %s195
      %p204 = scmp.eq.s32.totalorder %s21, 3
      %p205 = por %p203, %p204
      %p206 = scmp.ne.s32.totalorder %s195, %s196
      %p207 = scmp.eq.s32.totalorder %s21, 0
      %p208 = por %p206, %p207
      %p209 = scmp.ne.s32.totalorder %s195, %s196
      %p210 = scmp.eq.s32.totalorder %s22, 3
      %p211 = por %p209, %p210
      %p213 = scmp.ne.s32.totalorder %s196, %s212
      %p214 = scmp.eq.s32.totalorder %s22, 0
      %p215 = por %p213, %p214
      %p216 = scmp.le.s32.totalorder 1, %s16
      %p217 = scmp.lt.s32.totalorder %s16, 5
      %p218 = pnand %p216, %p217
      %p219 = pneg %p218
      // Predicated region
      $region9: #{bottleneck_forward.1} parent=5 // pred_check
        _
      $region10: #{bottleneck_forward.1} parent=5 // pred_check_branch
        %221 = sbr.rel (%p218) target = $region12
      $region11: #{bottleneck_forward.1} parent=5 // pred_region
        %s222 = ssub.s32 %s16, 1
        // Predicated region
        $region13: #{bottleneck_forward.1} parent=11 // pred_check
          %p223 = pneg %p75
        $region14: #{bottleneck_forward.1} parent=11 // pred_check_branch
          %225 = sbr.rel (%p223) target = $region16
        $region15: #{bottleneck_forward.1} parent=11 // pred_region
          _
        $region16: #{bottleneck_forward.1} parent=11 // pred_fallthru
          _
        // Predicated region
        $region17: #{bottleneck_forward.1} parent=11 // pred_check
          %p226 = pneg %p96
        $region18: #{bottleneck_forward.1} parent=11 // pred_check_branch
          %228 = sbr.rel (%p226) target = $region20
        $region19: #{bottleneck_forward.1} parent=11 // pred_region
          _
        $region20: #{bottleneck_forward.1} parent=11 // pred_fallthru
          _
        // Predicated region
        $region21: #{bottleneck_forward.1} parent=11 // pred_check
          %p229 = pneg %p117
        $region22: #{bottleneck_forward.1} parent=11 // pred_check_branch
          %231 = sbr.rel (%p229) target = $region24
        $region23: #{bottleneck_forward.1} parent=11 // pred_region
          _
        $region24: #{bottleneck_forward.1} parent=11 // pred_fallthru
          _
        // Predicated region
        $region25: #{bottleneck_forward.1} parent=11 // pred_check
          %p232 = pneg %p138
        $region26: #{bottleneck_forward.1} parent=11 // pred_check_branch
          %234 = sbr.rel (%p232) target = $region28
        $region27: #{bottleneck_forward.1} parent=11 // pred_region
          _
        $region28: #{bottleneck_forward.1} parent=11 // pred_fallthru
          _
        // Predicated region
        $region29: #{bottleneck_forward.1} parent=11 // pred_check
          %p235 = pneg %p159
        $region30: #{bottleneck_forward.1} parent=11 // pred_check_branch
          %237 = sbr.rel (%p235) target = $region32
        $region31: #{bottleneck_forward.1} parent=11 // pred_region
          _
        $region32: #{bottleneck_forward.1} parent=11 // pred_fallthru
          _
        // Predicated region
        $region33: #{bottleneck_forward.1} parent=11 // pred_check
          %p238 = pneg %p180
        $region34: #{bottleneck_forward.1} parent=11 // pred_check_branch
          %240 = sbr.rel (%p238) target = $region36
        $region35: #{bottleneck_forward.1} parent=11 // pred_region
          _
        $region36: #{bottleneck_forward.1} parent=11 // pred_fallthru
          _
      $region12: #{bottleneck_forward.1} parent=5 // pred_fallthru
        _
      %p241 = scmp.lt.s32.totalorder %s16, 4
      // Predicated region
      $region37: #{bottleneck_forward.1} parent=5 // pred_check
        %p242 = pneg %p241
      $region38: #{bottleneck_forward.1} parent=5 // pred_check_branch
        %244 = sbr.rel (%p242) target = $region40
      $region39: #{bottleneck_forward.1} parent=5 // pred_region
        // Predicated region
        $region41: #{bottleneck_forward.1} parent=39 // pred_check
          %p245 = pneg %p48
        $region42: #{bottleneck_forward.1} parent=39 // pred_check_branch
          %247 = sbr.rel (%p245) target = $region44
        $region43: #{bottleneck_forward.1} parent=39 // pred_region
          %p248 = scmp.lt.s32.totalorder %s23, 1
          %s249 = scalar_select %p248, %s23, 1
          %s250 = smul.addr %s249, 32
          %s251 = smul.addr %s250, 8
          %s252 = scalar_lea.vmem %s0, %s251
        $region44: #{bottleneck_forward.1} parent=39 // pred_fallthru
          _
      $region40: #{bottleneck_forward.1} parent=5 // pred_fallthru
        _
      %p253 = scmp.le.s32.totalorder 1, %s16
      %p254 = scmp.lt.s32.totalorder %s16, 5
      %p255 = pnand %p253, %p254
      %p256 = pneg %p255
      // Predicated region
      $region45: #{bottleneck_forward.1} parent=5 // pred_check
        _
      $region46: #{bottleneck_forward.1} parent=5 // pred_check_branch
        %258 = sbr.rel (%p255) target = $region48
      $region47: #{bottleneck_forward.1} parent=5 // pred_region
        %s259 = ssub.s32 %s16, 1
        %p260 = scmp.lt.s32.totalorder %s25, 1
        %s261 = scalar_select %p260, %s25, 1
        %s262 = smul.addr %s261, 32
        %s263 = smul.addr %s262, 8
        %s264 = scalar_lea.vmem %s0, %s263
        %p265 = pneg %p54
        %p266 = pneg %p51
        %p267 = pneg %p75
        %p268 = pneg %p72
        %p269 = pneg %p96
        %p270 = pneg %p93
        %p271 = pneg %p117
        %p272 = pneg %p114
        %p273 = pneg %p138
        %p274 = pneg %p135
        %p275 = pneg %p159
        %p276 = pneg %p156
        %p277 = pneg %p180
        %p278 = pneg %p177
        %p279 = pneg %p208
        %p280 = pneg %p205
        %s281 = sand.u32 %s195, 1
        %s282 = scalar_lea.sflag [#allocation4], %s281
        %s283 = sand.u32 %s195, 1
        %s284 = smul.addr %s283, 128
        %s285 = scalar_lea.vmem [#allocation3], %s284
        %p286 = scmp.lt.s32.totalorder %s25, 1
        %s287 = scalar_select %p286, %s25, 1
        %s288 = smul.addr %s287, 32
        %s289 = smul.addr %s288, 8
        %s290 = scalar_lea.vmem %s0, %s289
        %s291 = smul.u32 8, %s26
        %p293 = scmp.eq.s32.totalorder %s26, 0
        // Predicated region
        $region49: #{bottleneck_forward.1} parent=47 // pred_check
          %p294 = pneg %p293
        $region50: #{bottleneck_forward.1} parent=47 // pred_check_branch
          %296 = sbr.rel (%p294) target = $region52
        $region51: #{bottleneck_forward.1} parent=47 // pred_region
          %v297 = vld [vmem:[%s290] sm:$0xff]
          %v298 = vld [vmem:[%s290 + $0x8] sm:$0xff]
          %v299 = vld [vmem:[%s290 + $0x10] sm:$0xff]
          %v300 = vld [vmem:[%s290 + $0x18] sm:$0xff]
          %v301 = vld [vmem:[%s290 + $0x20] sm:$0xff]
          %v302 = vld [vmem:[%s290 + $0x28] sm:$0xff]
          %v303 = vld [vmem:[%s290 + $0x30] sm:$0xff]
          %v304 = vld [vmem:[%s290 + $0x38] sm:$0xff]
          %v305 = vld [vmem:[%s290 + $0x40] sm:$0xff]
          %v306 = vld [vmem:[%s290 + $0x48] sm:$0xff]
          %v307 = vld [vmem:[%s290 + $0x50] sm:$0xff]
          %v308 = vld [vmem:[%s290 + $0x58] sm:$0xff]
          %v309 = vld [vmem:[%s290 + $0x60] sm:$0xff]
          %v310 = vld [vmem:[%s290 + $0x68] sm:$0xff]
          %v311 = vld [vmem:[%s290 + $0x70] sm:$0xff]
          %v312 = vld [vmem:[%s290 + $0x78] sm:$0xff]
          %v313 = vld [vmem:[%s290 + $0x80] sm:$0xff]
          %v314 = vld [vmem:[%s290 + $0x88] sm:$0xff]
          %v315 = vld [vmem:[%s290 + $0x90] sm:$0xff]
          %v316 = vld [vmem:[%s290 + $0x98] sm:$0xff]
          %v317 = vld [vmem:[%s290 + $0xa0] sm:$0xff]
          %v318 = vld [vmem:[%s290 + $0xa8] sm:$0xff]
          %v319 = vld [vmem:[%s290 + $0xb0] sm:$0xff]
          %v320 = vld [vmem:[%s290 + $0xb8] sm:$0xff]
          %v321 = vld [vmem:[%s290 + $0xc0] sm:$0xff]
          %v322 = vld [vmem:[%s290 + $0xc8] sm:$0xff]
          %v323 = vld [vmem:[%s290 + $0xd0] sm:$0xff]
          %v324 = vld [vmem:[%s290 + $0xd8] sm:$0xff]
          %v325 = vld [vmem:[%s290 + $0xe0] sm:$0xff]
          %v326 = vld [vmem:[%s290 + $0xe8] sm:$0xff]
          %v327 = vld [vmem:[%s290 + $0xf0] sm:$0xff]
          %v328 = vld [vmem:[%s290 + $0xf8] sm:$0xff]
          %v329 = vpack.c.bf16 %v298, %v297
          %v330 = vpack.c.bf16 %v300, %v299
          %v331 = vpack.c.bf16 %v302, %v301
          %v332 = vpack.c.bf16 %v304, %v303
          %v333 = vpack.c.bf16 %v306, %v305
          %v334 = vpack.c.bf16 %v308, %v307
          %v335 = vpack.c.bf16 %v310, %v309
          %v336 = vpack.c.bf16 %v312, %v311
          %v337 = vpack.c.bf16 %v314, %v313
          %v338 = vpack.c.bf16 %v316, %v315
          %v339 = vpack.c.bf16 %v318, %v317
          %v340 = vpack.c.bf16 %v320, %v319
          %v341 = vpack.c.bf16 %v322, %v321
          %v342 = vpack.c.bf16 %v324, %v323
          %v343 = vpack.c.bf16 %v326, %v325
          %v344 = vpack.c.bf16 %v328, %v327
          %v345 = vld [vmem:[%s1] sm:$0xf]
          %v346 = vld [vmem:[%s1 + $0x4] sm:$0xf]
          %v347 = vld [vmem:[%s1 + $0x8] sm:$0xf]
          %v348 = vld [vmem:[%s1 + $0xc] sm:$0xf]
          %v349 = vld [vmem:[%s1 + $0x10] sm:$0xf]
          %v350 = vld [vmem:[%s1 + $0x14] sm:$0xf]
          %v351 = vld [vmem:[%s1 + $0x18] sm:$0xf]
          %v352 = vld [vmem:[%s1 + $0x1c] sm:$0xf]
          %v353 = vld [vmem:[%s2] sm:$0x1]
          %v355 = vlaneseq
          %v356 = vshrl.u32 %v355, 7
          %v357 = vsub.s32 0, %v356
          %v358 = vrot.slane %v353, %v357
          %v368 = vunpack.c.l.b16 %v345
          %v369 = vunpack.c.l.b16 %v346
          %v370 = vunpack.c.l.b16 %v347
          %v371 = vunpack.c.l.b16 %v348
          %v372 = vunpack.c.l.b16 %v349
          %v373 = vunpack.c.l.b16 %v350
          %v374 = vunpack.c.l.b16 %v351
          %v375 = vunpack.c.l.b16 %v352
          %v376 = vpack.c.b16 %v369, %v368
          %v377 = vpack.c.b16 %v371, %v370
          %v378 = vpack.c.b16 %v373, %v372
          %v379 = vpack.c.b16 %v375, %v374
          %vm384 = vcmask 523264
          %v386 = vsel %vm384, %v329, 0
          %v389 = vsel %vm384, %v330, 0
          %v392 = vsel %vm384, %v331, 0
          %v395 = vsel %vm384, %v332, 0
          %v398 = vsel %vm384, %v333, 0
          %v401 = vsel %vm384, %v334, 0
          %v404 = vsel %vm384, %v335, 0
          %v407 = vsel %vm384, %v336, 0
          %v410 = vsel %vm384, %v337, 0
          %v413 = vsel %vm384, %v338, 0
          %v416 = vsel %vm384, %v339, 0
          %v419 = vsel %vm384, %v340, 0
          %v422 = vsel %vm384, %v341, 0
          %v425 = vsel %vm384, %v342, 0
          %v428 = vsel %vm384, %v343, 0
          %v431 = vsel %vm384, %v344, 0
          %433 = vmatprep.subr.bf16.mxu0 0
          %434 = vmatpush1.bf16.msra.mxu0 %v376
          %435 = vmatprep.subr.bf16.mxu0 0
          %436 = vmatpush1.bf16.msra.mxu0 %v377
          %437 = vmatprep.subr.bf16.mxu0 0
          %438 = vmatpush1.bf16.msra.mxu0 %v378
          %439 = vmatprep.subr.bf16.mxu0 0
          %440 = vmatpush1.bf16.msra.mxu0 %v379
          %441 = vmatprep.subr.bf16.mxu0 0
          %442 = vmatpush1.bf16.msra.mxu0 0
          %443 = vmatprep.subr.bf16.mxu0 0
          %444 = vmatpush1.bf16.msra.mxu0 0
          %445 = vmatprep.subr.bf16.mxu0 0
          %446 = vmatpush1.bf16.msra.mxu0 0
          %447 = vmatprep.subr.bf16.mxu0 0
          %448 = vmatpush1.bf16.msra.mxu0 0
          %449 = vmatprep.subr.bf16.mxu0 0
          %450 = vmatpush1.bf16.msra.mxu0 0
          %451 = vmatprep.subr.bf16.mxu0 0
          %452 = vmatpush1.bf16.msra.mxu0 0
          %453 = vmatprep.subr.bf16.mxu0 0
          %454 = vmatpush1.bf16.msra.mxu0 0
          %455 = vmatprep.subr.bf16.mxu0 0
          %456 = vmatpush1.bf16.msra.mxu0 0
          %457 = vmatprep.subr.bf16.mxu0 0
          %458 = vmatpush1.bf16.msra.mxu0 0
          %459 = vmatprep.subr.bf16.mxu0 0
          %460 = vmatpush1.bf16.msra.mxu0 0
          %461 = vmatprep.subr.bf16.mxu0 0
          %462 = vmatpush1.bf16.msra.mxu0 0
          %463 = vmatprep.subr.bf16.mxu0 0
          %464 = vmatpush1.bf16.msra.mxu0 0
          %465 = vmatprep.mubr.bf16.mxu0 0
          %466 = vmatmul.mubr.bf16.gmra.mrb[0].mxu0 %v386
          %v467 = vpop.f32.mrb[0].mxu0
          %v468 = vadd.f32 %v358, %v467
          %v469 = vpop.f32.mrb[0].mxu0
          %v470 = vpop.f32.mrb[0].mxu0
          %v471 = vadd.f32 %v358, %v470
          %v472 = vpop.f32.mrb[0].mxu0
          %473 = vmatprep.mubr.bf16.mxu0 0
          %474 = vmatmul.mubr.bf16.gmra.mrb[0].mxu0 %v389
          %v475 = vpop.f32.mrb[0].mxu0
          %v476 = vadd.f32 %v358, %v475
          %v477 = vpop.f32.mrb[0].mxu0
          %v478 = vpop.f32.mrb[0].mxu0
          %v479 = vadd.f32 %v358, %v478
          %v480 = vpop.f32.mrb[0].mxu0
          %481 = vmatprep.mubr.bf16.mxu0 0
          %482 = vmatmul.mubr.bf16.gmra.mrb[0].mxu0 %v392
          %v483 = vpop.f32.mrb[0].mxu0
          %v484 = vadd.f32 %v358, %v483
          %v485 = vpop.f32.mrb[0].mxu0
          %v486 = vpop.f32.mrb[0].mxu0
          %v487 = vadd.f32 %v358, %v486
          %v488 = vpop.f32.mrb[0].mxu0
          %489 = vmatprep.mubr.bf16.mxu0 0
          %490 = vmatmul.mubr.bf16.gmra.mrb[0].mxu0 %v395
          %v491 = vpop.f32.mrb[0].mxu0
          %v492 = vadd.f32 %v358, %v491
          %v493 = vpop.f32.mrb[0].mxu0
          %v494 = vpop.f32.mrb[0].mxu0
          %v495 = vadd.f32 %v358, %v494
          %v496 = vpop.f32.mrb[0].mxu0
          %497 = vmatprep.mubr.bf16.mxu0 0
          %498 = vmatmul.mubr.bf16.gmra.mrb[0].mxu0 %v398
          %v499 = vpop.f32.mrb[0].mxu0
          %v500 = vadd.f32 %v358, %v499
          %v501 = vpop.f32.mrb[0].mxu0
          %v502 = vpop.f32.mrb[0].mxu0
          %v503 = vadd.f32 %v358, %v502
          %v504 = vpop.f32.mrb[0].mxu0
          %505 = vmatprep.mubr.bf16.mxu0 0
          %506 = vmatmul.mubr.bf16.gmra.mrb[0].mxu0 %v401
          %v507 = vpop.f32.mrb[0].mxu0
          %v508 = vadd.f32 %v358, %v507
          %v509 = vpop.f32.mrb[0].mxu0
          %v510 = vpop.f32.mrb[0].mxu0
          %v511 = vadd.f32 %v358, %v510
          %v512 = vpop.f32.mrb[0].mxu0
          %513 = vmatprep.mubr.bf16.mxu0 0
          %514 = vmatmul.mubr.bf16.gmra.mrb[0].mxu0 %v404
          %v515 = vpop.f32.mrb[0].mxu0
          %v516 = vadd.f32 %v358, %v515
          %v517 = vpop.f32.mrb[0].mxu0
          %v518 = vpop.f32.mrb[0].mxu0
          %v519 = vadd.f32 %v358, %v518
          %v520 = vpop.f32.mrb[0].mxu0
          %521 = vmatprep.mubr.bf16.mxu0 0
          %522 = vmatmul.mubr.bf16.gmra.mrb[0].mxu0 %v407
          %v523 = vpop.f32.mrb[0].mxu0
          %v524 = vadd.f32 %v358, %v523
          %v525 = vpop.f32.mrb[0].mxu0
          %v526 = vpop.f32.mrb[0].mxu0
          %v527 = vadd.f32 %v358, %v526
          %v528 = vpop.f32.mrb[0].mxu0
          %529 = vmatprep.mubr.bf16.mxu0 0
          %530 = vmatmul.mubr.bf16.gmra.mrb[0].mxu0 %v410
          %v531 = vpop.f32.mrb[0].mxu0
          %v532 = vadd.f32 %v358, %v531
          %v533 = vpop.f32.mrb[0].mxu0
          %v534 = vpop.f32.mrb[0].mxu0
          %v535 = vadd.f32 %v358, %v534
          %v536 = vpop.f32.mrb[0].mxu0
          %537 = vmatprep.mubr.bf16.mxu0 0
          %538 = vmatmul.mubr.bf16.gmra.mrb[0].mxu0 %v413
          %v539 = vpop.f32.mrb[0].mxu0
          %v540 = vadd.f32 %v358, %v539
          %v541 = vpop.f32.mrb[0].mxu0
          %v542 = vpop.f32.mrb[0].mxu0
          %v543 = vadd.f32 %v358, %v542
          %v544 = vpop.f32.mrb[0].mxu0
          %545 = vmatprep.mubr.bf16.mxu0 0
          %546 = vmatmul.mubr.bf16.gmra.mrb[0].mxu0 %v416
          %v547 = vpop.f32.mrb[0].mxu0
          %v548 = vadd.f32 %v358, %v547
          %v549 = vpop.f32.mrb[0].mxu0
          %v550 = vpop.f32.mrb[0].mxu0
          %v551 = vadd.f32 %v358, %v550
          %v552 = vpop.f32.mrb[0].mxu0
          %553 = vmatprep.mubr.bf16.mxu0 0
          %554 = vmatmul.mubr.bf16.gmra.mrb[0].mxu0 %v419
          %v555 = vpop.f32.mrb[0].mxu0
          %v556 = vadd.f32 %v358, %v555
          %v557 = vpop.f32.mrb[0].mxu0
          %v558 = vpop.f32.mrb[0].mxu0
          %v559 = vadd.f32 %v358, %v558
          %v560 = vpop.f32.mrb[0].mxu0
          %561 = vmatprep.mubr.bf16.mxu0 0
          %562 = vmatmul.mubr.bf16.gmra.mrb[0].mxu0 %v422
          %v563 = vpop.f32.mrb[0].mxu0
          %v564 = vadd.f32 %v358, %v563
          %v565 = vpop.f32.mrb[0].mxu0
          %v566 = vpop.f32.mrb[0].mxu0
          %v567 = vadd.f32 %v358, %v566
          %v568 = vpop.f32.mrb[0].mxu0
          %569 = vmatprep.mubr.bf16.mxu0 0
          %570 = vmatmul.mubr.bf16.gmra.mrb[0].mxu0 %v425
          %v571 = vpop.f32.mrb[0].mxu0
          %v572 = vadd.f32 %v358, %v571
          %v573 = vpop.f32.mrb[0].mxu0
          %v574 = vpop.f32.mrb[0].mxu0
          %v575 = vadd.f32 %v358, %v574
          %v576 = vpop.f32.mrb[0].mxu0
          %577 = vmatprep.mubr.bf16.mxu0 0
          %578 = vmatmul.mubr.bf16.gmra.mrb[0].mxu0 %v428
          %v579 = vpop.f32.mrb[0].mxu0
          %v580 = vadd.f32 %v358, %v579
          %v581 = vpop.f32.mrb[0].mxu0
          %v582 = vpop.f32.mrb[0].mxu0
          %v583 = vadd.f32 %v358, %v582
          %v584 = vpop.f32.mrb[0].mxu0
          %585 = vmatprep.mubr.bf16.mxu0 0
          %586 = vmatmul.mubr.bf16.gmra.mrb[0].mxu0 %v431
          %v587 = vpop.f32.mrb[0].mxu0
          %v588 = vadd.f32 %v358, %v587
          %v589 = vpop.f32.mrb[0].mxu0
          %v590 = vpop.f32.mrb[0].mxu0
          %v591 = vadd.f32 %v358, %v590
          %v592 = vpop.f32.mrb[0].mxu0
          %593 = vdwg.mxu0
          %v594 = vmax.f32 %v468, 0.0
          %v595 = vmax.f32 %v471, 0.0
          %v596 = vmax.f32 %v476, 0.0
          %v597 = vmax.f32 %v479, 0.0
          %v598 = vmax.f32 %v484, 0.0
          %v599 = vmax.f32 %v487, 0.0
          %v600 = vmax.f32 %v492, 0.0
          %v601 = vmax.f32 %v495, 0.0
          %v602 = vmax.f32 %v500, 0.0
          %v603 = vmax.f32 %v503, 0.0
          %v604 = vmax.f32 %v508, 0.0
          %v605 = vmax.f32 %v511, 0.0
          %v606 = vmax.f32 %v516, 0.0
          %v607 = vmax.f32 %v519, 0.0
          %v608 = vmax.f32 %v524, 0.0
          %v609 = vmax.f32 %v527, 0.0
          %v610 = vmax.f32 %v532, 0.0
          %v611 = vmax.f32 %v535, 0.0
          %v612 = vmax.f32 %v540, 0.0
          %v613 = vmax.f32 %v543, 0.0
          %v614 = vmax.f32 %v548, 0.0
          %v615 = vmax.f32 %v551, 0.0
          %v616 = vmax.f32 %v556, 0.0
          %v617 = vmax.f32 %v559, 0.0
          %v618 = vmax.f32 %v564, 0.0
          %v619 = vmax.f32 %v567, 0.0
          %v620 = vmax.f32 %v572, 0.0
          %v621 = vmax.f32 %v575, 0.0
          %v622 = vmax.f32 %v580, 0.0
          %v623 = vmax.f32 %v583, 0.0
          %v624 = vmax.f32 %v588, 0.0
          %v625 = vmax.f32 %v591, 0.0
          %vm626 = vcmask 261120
          %627 = vst.msk [vmem:[#allocation2 + $0x8] sm:$0xff] %vm626, 0.0
          %628 = vst.msk [vmem:[#allocation2 + $0x10] sm:$0xff] %vm626, 0.0
          %629 = vst.msk [vmem:[#allocation2 + $0x18] sm:$0xff] %vm626, %v594
          %630 = vst.msk [vmem:[#allocation2 + $0x20] sm:$0xff] %vm626, %v595
          %631 = vst.msk [vmem:[#allocation2 + $0x28] sm:$0xff] %vm626, %v596
          %632 = vst.msk [vmem:[#allocation2 + $0x30] sm:$0xff] %vm626, %v597
          %633 = vst.msk [vmem:[#allocation2 + $0x38] sm:$0xff] %vm626, %v598
          %634 = vst.msk [vmem:[#allocation2 + $0x40] sm:$0xff] %vm626, %v599
          %635 = vst.msk [vmem:[#allocation2 + $0x48] sm:$0xff] %vm626, %v600
          %636 = vst.msk [vmem:[#allocation2 + $0x50] sm:$0xff] %vm626, %v601
          %637 = vst.msk [vmem:[#allocation2 + $0x58] sm:$0xff] %vm626, %v602
          %638 = vst.msk [vmem:[#allocation2 + $0x60] sm:$0xff] %vm626, %v603
          %639 = vst.msk [vmem:[#allocation2 + $0x68] sm:$0xff] %vm626, %v604
          %640 = vst.msk [vmem:[#allocation2 + $0x70] sm:$0xff] %vm626, %v605
          %641 = vst.msk [vmem:[#allocation2 + $0x78] sm:$0xff] %vm626, %v606
          %642 = vst.msk [vmem:[#allocation2 + $0x80] sm:$0xff] %vm626, %v607
          %643 = vst.msk [vmem:[#allocation2 + $0x88] sm:$0xff] %vm626, %v608
          %644 = vst.msk [vmem:[#allocation2 + $0x90] sm:$0xff] %vm626, %v609
          %645 = vst.msk [vmem:[#allocation2 + $0x98] sm:$0xff] %vm626, %v610
          %646 = vst.msk [vmem:[#allocation2 + $0xa0] sm:$0xff] %vm626, %v611
          %647 = vst.msk [vmem:[#allocation2 + $0xa8] sm:$0xff] %vm626, %v612
          %648 = vst.msk [vmem:[#allocation2 + $0xb0] sm:$0xff] %vm626, %v613
          %649 = vst.msk [vmem:[#allocation2 + $0xb8] sm:$0xff] %vm626, %v614
          %650 = vst.msk [vmem:[#allocation2 + $0xc0] sm:$0xff] %vm626, %v615
          %651 = vst.msk [vmem:[#allocation2 + $0xc8] sm:$0xff] %vm626, %v616
          %652 = vst.msk [vmem:[#allocation2 + $0xd0] sm:$0xff] %vm626, %v617
          %653 = vst.msk [vmem:[#allocation2 + $0xd8] sm:$0xff] %vm626, %v618
          %654 = vst.msk [vmem:[#allocation2 + $0xe0] sm:$0xff] %vm626, %v619
          %655 = vst.msk [vmem:[#allocation2 + $0xe8] sm:$0xff] %vm626, %v620
          %656 = vst.msk [vmem:[#allocation2 + $0xf0] sm:$0xff] %vm626, %v621
          %657 = vst.msk [vmem:[#allocation2 + $0xf8] sm:$0xff] %vm626, %v622
          %658 = vst.msk [vmem:[#allocation2 + $0x100] sm:$0xff] %vm626, %v623
          %659 = vst.msk [vmem:[#allocation2 + $0x108] sm:$0xff] %vm626, %v624
          %660 = vst.msk [vmem:[#allocation2 + $0x110] sm:$0xff] %vm626, %v625
          %661 = vst.msk [vmem:[#allocation2 + $0x118] sm:$0xff] %vm626, 0.0
          %662 = vst.msk [vmem:[#allocation2 + $0x120] sm:$0xff] %vm626, 0.0
        $region52: #{bottleneck_forward.1} parent=47 // pred_fallthru
          _
        %s663 = smul.u32 %s26, 128
        %s664 = sadd.s32 %s663, 8
        %v665 = vlaneseq
        %v666 = vshrl.u32 %v665, 7
        %v667 = vadd.s32 %v666, 8
        %v668 = vadd.s32 %v666, 16
        %v669 = vadd.s32 %v666, 24
        %v670 = vadd.s32 %v666, 32
        %v671 = vadd.s32 %v666, 40
        %v672 = vadd.s32 %v666, 48
        %v673 = vadd.s32 %v666, 56
        %v674 = vadd.s32 %v666, 64
        %v675 = vadd.s32 %v666, 72
        %v676 = vadd.s32 %v666, 80
        %v677 = vadd.s32 %v666, 88
        %v678 = vadd.s32 %v666, 96
        %v679 = vadd.s32 %v666, 104
        %v680 = vadd.s32 %v666, 112
        %v681 = vadd.s32 %v666, 120
        %vm682 = vcmp.lt.s32.totalorder %v666, 0
        %v683 = vsub.s32 0, %v666
        %v684 = vsel %vm682, %v683, %v666
        %v685 = vshrl.u32 %v684, 4
        %v686 = vand.u32 %v684, 15
        %v687 = vsub.s32 0, %v686
        %v688 = vsel %vm682, %v687, %v686
        %vm689 = vcmp.lt.s32.totalorder %v667, 0
        %v690 = vsub.s32 0, %v667
        %v691 = vsel %vm689, %v690, %v667
        %v692 = vshrl.u32 %v691, 4
        %v693 = vand.u32 %v691, 15
        %v694 = vsub.s32 0, %v693
        %v695 = vsel %vm689, %v694, %v693
        %vm696 = vcmp.lt.s32.totalorder %v668, 0
        %v697 = vsub.s32 0, %v668
        %v698 = vsel %vm696, %v697, %v668
        %v699 = vshrl.u32 %v698, 4
        %v700 = vand.u32 %v698, 15
        %v701 = vsub.s32 0, %v700
        %v702 = vsel %vm696, %v701, %v700
        %vm703 = vcmp.lt.s32.totalorder %v669, 0
        %v704 = vsub.s32 0, %v669
        %v705 = vsel %vm703, %v704, %v669
        %v706 = vshrl.u32 %v705, 4
        %v707 = vand.u32 %v705, 15
        %v708 = vsub.s32 0, %v707
        %v709 = vsel %vm703, %v708, %v707
        %vm710 = vcmp.lt.s32.totalorder %v670, 0
        %v711 = vsub.s32 0, %v670
        %v712 = vsel %vm710, %v711, %v670
        %v713 = vshrl.u32 %v712, 4
        %v714 = vand.u32 %v712, 15
        %v715 = vsub.s32 0, %v714
        %v716 = vsel %vm710, %v715, %v714
        %vm717 = vcmp.lt.s32.totalorder %v671, 0
        %v718 = vsub.s32 0, %v671
        %v719 = vsel %vm717, %v718, %v671
        %v720 = vshrl.u32 %v719, 4
        %v721 = vand.u32 %v719, 15
        %v722 = vsub.s32 0, %v721
        %v723 = vsel %vm717, %v722, %v721
        %vm724 = vcmp.lt.s32.totalorder %v672, 0
        %v725 = vsub.s32 0, %v672
        %v726 = vsel %vm724, %v725, %v672
        %v727 = vshrl.u32 %v726, 4
        %v728 = vand.u32 %v726, 15
        %v729 = vsub.s32 0, %v728
        %v730 = vsel %vm724, %v729, %v728
        %vm731 = vcmp.lt.s32.totalorder %v673, 0
        %v732 = vsub.s32 0, %v673
        %v733 = vsel %vm731, %v732, %v673
        %v734 = vshrl.u32 %v733, 4
        %v735 = vand.u32 %v733, 15
        %v736 = vsub.s32 0, %v735
        %v737 = vsel %vm731, %v736, %v735
        %vm738 = vcmp.lt.s32.totalorder %v674, 0
        %v739 = vsub.s32 0, %v674
        %v740 = vsel %vm738, %v739, %v674
        %v741 = vshrl.u32 %v740, 4
        %v742 = vand.u32 %v740, 15
        %v743 = vsub.s32 0, %v742
        %v744 = vsel %vm738, %v743, %v742
        %vm745 = vcmp.lt.s32.totalorder %v675, 0
        %v746 = vsub.s32 0, %v675
        %v747 = vsel %vm745, %v746, %v675
        %v748 = vshrl.u32 %v747, 4
        %v749 = vand.u32 %v747, 15
        %v750 = vsub.s32 0, %v749
        %v751 = vsel %vm745, %v750, %v749
        %vm752 = vcmp.lt.s32.totalorder %v676, 0
        %v753 = vsub.s32 0, %v676
        %v754 = vsel %vm752, %v753, %v676
        %v755 = vshrl.u32 %v754, 4
        %v756 = vand.u32 %v754, 15
        %v757 = vsub.s32 0, %v756
        %v758 = vsel %vm752, %v757, %v756
        %vm759 = vcmp.lt.s32.totalorder %v677, 0
        %v760 = vsub.s32 0, %v677
        %v761 = vsel %vm759, %v760, %v677
        %v762 = vshrl.u32 %v761, 4
        %v763 = vand.u32 %v761, 15
        %v764 = vsub.s32 0, %v763
        %v765 = vsel %vm759, %v764, %v763
        %vm766 = vcmp.lt.s32.totalorder %v678, 0
        %v767 = vsub.s32 0, %v678
        %v768 = vsel %vm766, %v767, %v678
        %v769 = vshrl.u32 %v768, 4
        %v770 = vand.u32 %v768, 15
        %v771 = vsub.s32 0, %v770
        %v772 = vsel %vm766, %v771, %v770
        %vm773 = vcmp.lt.s32.totalorder %v679, 0
        %v774 = vsub.s32 0, %v679
        %v775 = vsel %vm773, %v774, %v679
        %v776 = vshrl.u32 %v775, 4
        %v777 = vand.u32 %v775, 15
        %v778 = vsub.s32 0, %v777
        %v779 = vsel %vm773, %v778, %v777
        %vm780 = vcmp.lt.s32.totalorder %v680, 0
        %v781 = vsub.s32 0, %v680
        %v782 = vsel %vm780, %v781, %v680
        %v783 = vshrl.u32 %v782, 4
        %v784 = vand.u32 %v782, 15
        %v785 = vsub.s32 0, %v784
        %v786 = vsel %vm780, %v785, %v784
        %vm787 = vcmp.lt.s32.totalorder %v681, 0
        %v788 = vsub.s32 0, %v681
        %v789 = vsel %vm787, %v788, %v681
        %v790 = vshrl.u32 %v789, 4
        %v791 = vand.u32 %v789, 15
        %v792 = vsub.s32 0, %v791
        %v793 = vsel %vm787, %v792, %v791
        %vm794 = vcmp.ne.s32.totalorder %v688, 0
        %vm795 = vcmp.ne.s32.totalorder %v695, 0
        %vm796 = vcmp.ne.s32.totalorder %v702, 0
        %vm797 = vcmp.ne.s32.totalorder %v709, 0
        %vm798 = vcmp.ne.s32.totalorder %v716, 0
        %vm799 = vcmp.ne.s32.totalorder %v723, 0
        %vm800 = vcmp.ne.s32.totalorder %v730, 0
        %vm801 = vcmp.ne.s32.totalorder %v737, 0
        %vm802 = vcmp.ne.s32.totalorder %v744, 0
        %vm803 = vcmp.ne.s32.totalorder %v751, 0
        %vm804 = vcmp.ne.s32.totalorder %v758, 0
        %vm805 = vcmp.ne.s32.totalorder %v765, 0
        %vm806 = vcmp.ne.s32.totalorder %v772, 0
        %vm807 = vcmp.ne.s32.totalorder %v779, 0
        %vm808 = vcmp.ne.s32.totalorder %v786, 0
        %vm809 = vcmp.ne.s32.totalorder %v793, 0
        %vm810 = vcmp.lt.s32.totalorder %v688, 0
        %vm811 = vcmp.lt.s32.totalorder %v695, 0
        %vm812 = vcmp.lt.s32.totalorder %v702, 0
        %vm813 = vcmp.lt.s32.totalorder %v709, 0
        %vm814 = vcmp.lt.s32.totalorder %v716, 0
        %vm815 = vcmp.lt.s32.totalorder %v723, 0
        %vm816 = vcmp.lt.s32.totalorder %v730, 0
        %vm817 = vcmp.lt.s32.totalorder %v737, 0
        %vm818 = vcmp.lt.s32.totalorder %v744, 0
        %vm819 = vcmp.lt.s32.totalorder %v751, 0
        %vm820 = vcmp.lt.s32.totalorder %v758, 0
        %vm821 = vcmp.lt.s32.totalorder %v765, 0
        %vm822 = vcmp.lt.s32.totalorder %v772, 0
        %vm823 = vcmp.lt.s32.totalorder %v779, 0
        %vm824 = vcmp.lt.s32.totalorder %v786, 0
        %vm825 = vcmp.lt.s32.totalorder %v793, 0
        %vm826 = vmand %vm810, %vm794
        %vm827 = vmand %vm811, %vm795
        %vm828 = vmand %vm812, %vm796
        %vm829 = vmand %vm813, %vm797
        %vm830 = vmand %vm814, %vm798
        %vm831 = vmand %vm815, %vm799
        %vm832 = vmand %vm816, %vm800
        %vm833 = vmand %vm817, %vm801
        %vm834 = vmand %vm818, %vm802
        %vm835 = vmand %vm819, %vm803
        %vm836 = vmand %vm820, %vm804
        %vm837 = vmand %vm821, %vm805
        %vm838 = vmand %vm822, %vm806
        %vm839 = vmand %vm823, %vm807
        %vm840 = vmand %vm824, %vm808
        %vm841 = vmand %vm825, %vm809
        %v842 = vadd.s32 %v688, 16
        %v843 = vadd.s32 %v695, 16
        %v844 = vadd.s32 %v702, 16
        %v845 = vadd.s32 %v709, 16
        %v846 = vadd.s32 %v716, 16
        %v847 = vadd.s32 %v723, 16
        %v848 = vadd.s32 %v730, 16
        %v849 = vadd.s32 %v737, 16
        %v850 = vadd.s32 %v744, 16
        %v851 = vadd.s32 %v751, 16
        %v852 = vadd.s32 %v758, 16
        %v853 = vadd.s32 %v765, 16
        %v854 = vadd.s32 %v772, 16
        %v855 = vadd.s32 %v779, 16
        %v856 = vadd.s32 %v786, 16
        %v857 = vadd.s32 %v793, 16
        %v858 = vsel %vm826, %v842, %v688
        %v859 = vsel %vm827, %v843, %v695
        %v860 = vsel %vm828, %v844, %v702
        %v861 = vsel %vm829, %v845, %v709
        %v862 = vsel %vm830, %v846, %v716
        %v863 = vsel %vm831, %v847, %v723
        %v864 = vsel %vm832, %v848, %v730
        %v865 = vsel %vm833, %v849, %v737
        %v866 = vsel %vm834, %v850, %v744
        %v867 = vsel %vm835, %v851, %v751
        %v868 = vsel %vm836, %v852, %v758
        %v869 = vsel %vm837, %v853, %v765
        %v870 = vsel %vm838, %v854, %v772
        %v871 = vsel %vm839, %v855, %v779
        %v872 = vsel %vm840, %v856, %v786
        %v873 = vsel %vm841, %v857, %v793
        %vm874 = vcmp.ge.s32.totalorder %v858, 1
        %vm875 = vcmp.ge.s32.totalorder %v859, 1
        %vm876 = vcmp.ge.s32.totalorder %v860, 1
        %vm877 = vcmp.ge.s32.totalorder %v861, 1
        %vm878 = vcmp.ge.s32.totalorder %v862, 1
        %vm879 = vcmp.ge.s32.totalorder %v863, 1
        %vm880 = vcmp.ge.s32.totalorder %v864, 1
        %vm881 = vcmp.ge.s32.totalorder %v865, 1
        %vm882 = vcmp.ge.s32.totalorder %v866, 1
        %vm883 = vcmp.ge.s32.totalorder %v867, 1
        %vm884 = vcmp.ge.s32.totalorder %v868, 1
        %vm885 = vcmp.ge.s32.totalorder %v869, 1
        %vm886 = vcmp.ge.s32.totalorder %v870, 1
        %vm887 = vcmp.ge.s32.totalorder %v871, 1
        %vm888 = vcmp.ge.s32.totalorder %v872, 1
        %vm889 = vcmp.ge.s32.totalorder %v873, 1
        %vm890 = vcmp.le.s32.totalorder %v858, 14
        %vm891 = vcmp.le.s32.totalorder %v859, 14
        %vm892 = vcmp.le.s32.totalorder %v860, 14
        %vm893 = vcmp.le.s32.totalorder %v861, 14
        %vm894 = vcmp.le.s32.totalorder %v862, 14
        %vm895 = vcmp.le.s32.totalorder %v863, 14
        %vm896 = vcmp.le.s32.totalorder %v864, 14
        %vm897 = vcmp.le.s32.totalorder %v865, 14
        %vm898 = vcmp.le.s32.totalorder %v866, 14
        %vm899 = vcmp.le.s32.totalorder %v867, 14
        %vm900 = vcmp.le.s32.totalorder %v868, 14
        %vm901 = vcmp.le.s32.totalorder %v869, 14
        %vm902 = vcmp.le.s32.totalorder %v870, 14
        %vm903 = vcmp.le.s32.totalorder %v871, 14
        %vm904 = vcmp.le.s32.totalorder %v872, 14
        %vm905 = vcmp.le.s32.totalorder %v873, 14
        %s906 = sadd.s32 %s664, 4294967295
        %s907 = scalar_lea.vmem [#allocation2], %s906
        %v908 = vld [vmem:[%s907] sm:$0xff]
        %v909 = vld [vmem:[%s907 + $0x8] sm:$0xff]
        %v910 = vld [vmem:[%s907 + $0x10] sm:$0xff]
        %v911 = vld [vmem:[%s907 + $0x18] sm:$0xff]
        %v912 = vld [vmem:[%s907 + $0x20] sm:$0xff]
        %v913 = vld [vmem:[%s907 + $0x28] sm:$0xff]
        %v914 = vld [vmem:[%s907 + $0x30] sm:$0xff]
        %v915 = vld [vmem:[%s907 + $0x38] sm:$0xff]
        %v916 = vld [vmem:[%s907 + $0x40] sm:$0xff]
        %v917 = vld [vmem:[%s907 + $0x48] sm:$0xff]
        %v918 = vld [vmem:[%s907 + $0x50] sm:$0xff]
        %v919 = vld [vmem:[%s907 + $0x58] sm:$0xff]
        %v920 = vld [vmem:[%s907 + $0x60] sm:$0xff]
        %v921 = vld [vmem:[%s907 + $0x68] sm:$0xff]
        %v922 = vld [vmem:[%s907 + $0x70] sm:$0xff]
        %v923 = vld [vmem:[%s907 + $0x78] sm:$0xff]
        %v924 = vsel %vm874, 1, 0
        %v925 = vsel %vm875, 1, 0
        %v926 = vsel %vm876, 1, 0
        %v927 = vsel %vm877, 1, 0
        %v928 = vsel %vm878, 1, 0
        %v929 = vsel %vm879, 1, 0
        %v930 = vsel %vm880, 1, 0
        %v931 = vsel %vm881, 1, 0
        %v932 = vsel %vm882, 1, 0
        %v933 = vsel %vm883, 1, 0
        %v934 = vsel %vm884, 1, 0
        %v935 = vsel %vm885, 1, 0
        %v936 = vsel %vm886, 1, 0
        %v937 = vsel %vm887, 1, 0
        %v938 = vsel %vm888, 1, 0
        %v939 = vsel %vm889, 1, 0
        %vm940 = vcmp.eq.s32.totalorder %v924, 1
        %vm941 = vcmp.eq.s32.totalorder %v925, 1
        %vm942 = vcmp.eq.s32.totalorder %v926, 1
        %vm943 = vcmp.eq.s32.totalorder %v927, 1
        %vm944 = vcmp.eq.s32.totalorder %v928, 1
        %vm945 = vcmp.eq.s32.totalorder %v929, 1
        %vm946 = vcmp.eq.s32.totalorder %v930, 1
        %vm947 = vcmp.eq.s32.totalorder %v931, 1
        %vm948 = vcmp.eq.s32.totalorder %v932, 1
        %vm949 = vcmp.eq.s32.totalorder %v933, 1
        %vm950 = vcmp.eq.s32.totalorder %v934, 1
        %vm951 = vcmp.eq.s32.totalorder %v935, 1
        %vm952 = vcmp.eq.s32.totalorder %v936, 1
        %vm953 = vcmp.eq.s32.totalorder %v937, 1
        %vm954 = vcmp.eq.s32.totalorder %v938, 1
        %vm955 = vcmp.eq.s32.totalorder %v939, 1
        %v956 = vsel %vm940, %v908, 0.0
        %v957 = vsel %vm941, %v909, 0.0
        %v958 = vsel %vm942, %v910, 0.0
        %v959 = vsel %vm943, %v911, 0.0
        %v960 = vsel %vm944, %v912, 0.0
        %v961 = vsel %vm945, %v913, 0.0
        %v962 = vsel %vm946, %v914, 0.0
        %v963 = vsel %vm947, %v915, 0.0
        %v964 = vsel %vm948, %v916, 0.0
        %v965 = vsel %vm949, %v917, 0.0
        %v966 = vsel %vm950, %v918, 0.0
        %v967 = vsel %vm951, %v919, 0.0
        %v968 = vsel %vm952, %v920, 0.0
        %v969 = vsel %vm953, %v921, 0.0
        %v970 = vsel %vm954, %v922, 0.0
        %v971 = vsel %vm955, %v923, 0.0
        %s972 = scalar_lea.vmem [#allocation2], %s664
        %v973 = vld [vmem:[%s972] sm:$0xff]
        %v974 = vld [vmem:[%s972 + $0x8] sm:$0xff]
        %v975 = vld [vmem:[%s972 + $0x10] sm:$0xff]
        %v976 = vld [vmem:[%s972 + $0x18] sm:$0xff]
        %v977 = vld [vmem:[%s972 + $0x20] sm:$0xff]
        %v978 = vld [vmem:[%s972 + $0x28] sm:$0xff]
        %v979 = vld [vmem:[%s972 + $0x30] sm:$0xff]
        %v980 = vld [vmem:[%s972 + $0x38] sm:$0xff]
        %v981 = vld [vmem:[%s972 + $0x40] sm:$0xff]
        %v982 = vld [vmem:[%s972 + $0x48] sm:$0xff]
        %v983 = vld [vmem:[%s972 + $0x50] sm:$0xff]
        %v984 = vld [vmem:[%s972 + $0x58] sm:$0xff]
        %v985 = vld [vmem:[%s972 + $0x60] sm:$0xff]
        %v986 = vld [vmem:[%s972 + $0x68] sm:$0xff]
        %v987 = vld [vmem:[%s972 + $0x70] sm:$0xff]
        %v988 = vld [vmem:[%s972 + $0x78] sm:$0xff]
        %s989 = sadd.s32 %s664, 1
        %s990 = scalar_lea.vmem [#allocation2], %s989
        %v991 = vld [vmem:[%s990] sm:$0xff]
        %v992 = vld [vmem:[%s990 + $0x8] sm:$0xff]
        %v993 = vld [vmem:[%s990 + $0x10] sm:$0xff]
        %v994 = vld [vmem:[%s990 + $0x18] sm:$0xff]
        %v995 = vld [vmem:[%s990 + $0x20] sm:$0xff]
        %v996 = vld [vmem:[%s990 + $0x28] sm:$0xff]
        %v997 = vld [vmem:[%s990 + $0x30] sm:$0xff]
        %v998 = vld [vmem:[%s990 + $0x38] sm:$0xff]
        %v999 = vld [vmem:[%s990 + $0x40] sm:$0xff]
        %v1000 = vld [vmem:[%s990 + $0x48] sm:$0xff]
        %v1001 = vld [vmem:[%s990 + $0x50] sm:$0xff]
        %v1002 = vld [vmem:[%s990 + $0x58] sm:$0xff]
        %v1003 = vld [vmem:[%s990 + $0x60] sm:$0xff]
        %v1004 = vld [vmem:[%s990 + $0x68] sm:$0xff]
        %v1005 = vld [vmem:[%s990 + $0x70] sm:$0xff]
        %v1006 = vld [vmem:[%s990 + $0x78] sm:$0xff]
        %v1007 = vsel %vm890, 1, 0
        %v1008 = vsel %vm891, 1, 0
        %v1009 = vsel %vm892, 1, 0
        %v1010 = vsel %vm893, 1, 0
        %v1011 = vsel %vm894, 1, 0
        %v1012 = vsel %vm895, 1, 0
        %v1013 = vsel %vm896, 1, 0
        %v1014 = vsel %vm897, 1, 0
        %v1015 = vsel %vm898, 1, 0
        %v1016 = vsel %vm899, 1, 0
        %v1017 = vsel %vm900, 1, 0
        %v1018 = vsel %vm901, 1, 0
        %v1019 = vsel %vm902, 1, 0
        %v1020 = vsel %vm903, 1, 0
        %v1021 = vsel %vm904, 1, 0
        %v1022 = vsel %vm905, 1, 0
        %vm1023 = vcmp.eq.s32.totalorder %v1007, 1
        %vm1024 = vcmp.eq.s32.totalorder %v1008, 1
        %vm1025 = vcmp.eq.s32.totalorder %v1009, 1
        %vm1026 = vcmp.eq.s32.totalorder %v1010, 1
        %vm1027 = vcmp.eq.s32.totalorder %v1011, 1
        %vm1028 = vcmp.eq.s32.totalorder %v1012, 1
        %vm1029 = vcmp.eq.s32.totalorder %v1013, 1
        %vm1030 = vcmp.eq.s32.totalorder %v1014, 1
        %vm1031 = vcmp.eq.s32.totalorder %v1015, 1
        %vm1032 = vcmp.eq.s32.totalorder %v1016, 1
        %vm1033 = vcmp.eq.s32.totalorder %v1017, 1
        %vm1034 = vcmp.eq.s32.totalorder %v1018, 1
        %vm1035 = vcmp.eq.s32.totalorder %v1019, 1
        %vm1036 = vcmp.eq.s32.totalorder %v1020, 1
        %vm1037 = vcmp.eq.s32.totalorder %v1021, 1
        %vm1038 = vcmp.eq.s32.totalorder %v1022, 1
        %v1039 = vsel %vm1023, %v991, 0.0
        %v1040 = vsel %vm1024, %v992, 0.0
        %v1041 = vsel %vm1025, %v993, 0.0
        %v1042 = vsel %vm1026, %v994, 0.0
        %v1043 = vsel %vm1027, %v995, 0.0
        %v1044 = vsel %vm1028, %v996, 0.0
        %v1045 = vsel %vm1029, %v997, 0.0
        %v1046 = vsel %vm1030, %v998, 0.0
        %v1047 = vsel %vm1031, %v999, 0.0
        %v1048 = vsel %vm1032, %v1000, 0.0
        %v1049 = vsel %vm1033, %v1001, 0.0
        %v1050 = vsel %vm1034, %v1002, 0.0
        %v1051 = vsel %vm1035, %v1003, 0.0
        %v1052 = vsel %vm1036, %v1004, 0.0
        %v1053 = vsel %vm1037, %v1005, 0.0
        %v1054 = vsel %vm1038, %v1006, 0.0
        %s1055 = sadd.s32 %s664, 15
        %s1056 = scalar_lea.vmem [#allocation2], %s1055
        %v1057 = vld [vmem:[%s1056] sm:$0xff]
        %v1058 = vld [vmem:[%s1056 + $0x8] sm:$0xff]
        %v1059 = vld [vmem:[%s1056 + $0x10] sm:$0xff]
        %v1060 = vld [vmem:[%s1056 + $0x18] sm:$0xff]
        %v1061 = vld [vmem:[%s1056 + $0x20] sm:$0xff]
        %v1062 = vld [vmem:[%s1056 + $0x28] sm:$0xff]
        %v1063 = vld [vmem:[%s1056 + $0x30] sm:$0xff]
        %v1064 = vld [vmem:[%s1056 + $0x38] sm:$0xff]
        %v1065 = vld [vmem:[%s1056 + $0x40] sm:$0xff]
        %v1066 = vld [vmem:[%s1056 + $0x48] sm:$0xff]
        %v1067 = vld [vmem:[%s1056 + $0x50] sm:$0xff]
        %v1068 = vld [vmem:[%s1056 + $0x58] sm:$0xff]
        %v1069 = vld [vmem:[%s1056 + $0x60] sm:$0xff]
        %v1070 = vld [vmem:[%s1056 + $0x68] sm:$0xff]
        %v1071 = vld [vmem:[%s1056 + $0x70] sm:$0xff]
        %v1072 = vld [vmem:[%s1056 + $0x78] sm:$0xff]
        %v1073 = vsel %vm940, %v1057, 0.0
        %v1074 = vsel %vm941, %v1058, 0.0
        %v1075 = vsel %vm942, %v1059, 0.0
        %v1076 = vsel %vm943, %v1060, 0.0
        %v1077 = vsel %vm944, %v1061, 0.0
        %v1078 = vsel %vm945, %v1062, 0.0
        %v1079 = vsel %vm946, %v1063, 0.0
        %v1080 = vsel %vm947, %v1064, 0.0
        %v1081 = vsel %vm948, %v1065, 0.0
        %v1082 = vsel %vm949, %v1066, 0.0
        %v1083 = vsel %vm950, %v1067, 0.0
        %v1084 = vsel %vm951, %v1068, 0.0
        %v1085 = vsel %vm952, %v1069, 0.0
        %v1086 = vsel %vm953, %v1070, 0.0
        %v1087 = vsel %vm954, %v1071, 0.0
        %v1088 = vsel %vm955, %v1072, 0.0
        %s1089 = sadd.s32 %s664, 16
        %s1090 = scalar_lea.vmem [#allocation2], %s1089
        %v1091 = vld [vmem:[%s1090] sm:$0xff]
        %v1092 = vld [vmem:[%s1090 + $0x8] sm:$0xff]
        %v1093 = vld [vmem:[%s1090 + $0x10] sm:$0xff]
        %v1094 = vld [vmem:[%s1090 + $0x18] sm:$0xff]
        %v1095 = vld [vmem:[%s1090 + $0x20] sm:$0xff]
        %v1096 = vld [vmem:[%s1090 + $0x28] sm:$0xff]
        %v1097 = vld [vmem:[%s1090 + $0x30] sm:$0xff]
        %v1098 = vld [vmem:[%s1090 + $0x38] sm:$0xff]
        %v1099 = vld [vmem:[%s1090 + $0x40] sm:$0xff]
        %v1100 = vld [vmem:[%s1090 + $0x48] sm:$0xff]
        %v1101 = vld [vmem:[%s1090 + $0x50] sm:$0xff]
        %v1102 = vld [vmem:[%s1090 + $0x58] sm:$0xff]
        %v1103 = vld [vmem:[%s1090 + $0x60] sm:$0xff]
        %v1104 = vld [vmem:[%s1090 + $0x68] sm:$0xff]
        %v1105 = vld [vmem:[%s1090 + $0x70] sm:$0xff]
        %v1106 = vld [vmem:[%s1090 + $0x78] sm:$0xff]
        %s1107 = sadd.s32 %s664, 17
        %s1108 = scalar_lea.vmem [#allocation2], %s1107
        %v1109 = vld [vmem:[%s1108] sm:$0xff]
        %v1110 = vld [vmem:[%s1108 + $0x8] sm:$0xff]
        %v1111 = vld [vmem:[%s1108 + $0x10] sm:$0xff]
        %v1112 = vld [vmem:[%s1108 + $0x18] sm:$0xff]
        %v1113 = vld [vmem:[%s1108 + $0x20] sm:$0xff]
        %v1114 = vld [vmem:[%s1108 + $0x28] sm:$0xff]
        %v1115 = vld [vmem:[%s1108 + $0x30] sm:$0xff]
        %v1116 = vld [vmem:[%s1108 + $0x38] sm:$0xff]
        %v1117 = vld [vmem:[%s1108 + $0x40] sm:$0xff]
        %v1118 = vld [vmem:[%s1108 + $0x48] sm:$0xff]
        %v1119 = vld [vmem:[%s1108 + $0x50] sm:$0xff]
        %v1120 = vld [vmem:[%s1108 + $0x58] sm:$0xff]
        %v1121 = vld [vmem:[%s1108 + $0x60] sm:$0xff]
        %v1122 = vld [vmem:[%s1108 + $0x68] sm:$0xff]
        %v1123 = vld [vmem:[%s1108 + $0x70] sm:$0xff]
        %v1124 = vld [vmem:[%s1108 + $0x78] sm:$0xff]
        %v1125 = vsel %vm1023, %v1109, 0.0
        %v1126 = vsel %vm1024, %v1110, 0.0
        %v1127 = vsel %vm1025, %v1111, 0.0
        %v1128 = vsel %vm1026, %v1112, 0.0
        %v1129 = vsel %vm1027, %v1113, 0.0
        %v1130 = vsel %vm1028, %v1114, 0.0
        %v1131 = vsel %vm1029, %v1115, 0.0
        %v1132 = vsel %vm1030, %v1116, 0.0
        %v1133 = vsel %vm1031, %v1117, 0.0
        %v1134 = vsel %vm1032, %v1118, 0.0
        %v1135 = vsel %vm1033, %v1119, 0.0
        %v1136 = vsel %vm1034, %v1120, 0.0
        %v1137 = vsel %vm1035, %v1121, 0.0
        %v1138 = vsel %vm1036, %v1122, 0.0
        %v1139 = vsel %vm1037, %v1123, 0.0
        %v1140 = vsel %vm1038, %v1124, 0.0
        %s1141 = sadd.s32 %s664, 31
        %s1142 = scalar_lea.vmem [#allocation2], %s1141
        %v1143 = vld [vmem:[%s1142] sm:$0xff]
        %v1144 = vld [vmem:[%s1142 + $0x8] sm:$0xff]
        %v1145 = vld [vmem:[%s1142 + $0x10] sm:$0xff]
        %v1146 = vld [vmem:[%s1142 + $0x18] sm:$0xff]
        %v1147 = vld [vmem:[%s1142 + $0x20] sm:$0xff]
        %v1148 = vld [vmem:[%s1142 + $0x28] sm:$0xff]
        %v1149 = vld [vmem:[%s1142 + $0x30] sm:$0xff]
        %v1150 = vld [vmem:[%s1142 + $0x38] sm:$0xff]
        %v1151 = vld [vmem:[%s1142 + $0x40] sm:$0xff]
        %v1152 = vld [vmem:[%s1142 + $0x48] sm:$0xff]
        %v1153 = vld [vmem:[%s1142 + $0x50] sm:$0xff]
        %v1154 = vld [vmem:[%s1142 + $0x58] sm:$0xff]
        %v1155 = vld [vmem:[%s1142 + $0x60] sm:$0xff]
        %v1156 = vld [vmem:[%s1142 + $0x68] sm:$0xff]
        %v1157 = vld [vmem:[%s1142 + $0x70] sm:$0xff]
        %v1158 = vld [vmem:[%s1142 + $0x78] sm:$0xff]
        %v1159 = vsel %vm940, %v1143, 0.0
        %v1160 = vsel %vm941, %v1144, 0.0
        %v1161 = vsel %vm942, %v1145, 0.0
        %v1162 = vsel %vm943, %v1146, 0.0
        %v1163 = vsel %vm944, %v1147, 0.0
        %v1164 = vsel %vm945, %v1148, 0.0
        %v1165 = vsel %vm946, %v1149, 0.0
        %v1166 = vsel %vm947, %v1150, 0.0
        %v1167 = vsel %vm948, %v1151, 0.0
        %v1168 = vsel %vm949, %v1152, 0.0
        %v1169 = vsel %vm950, %v1153, 0.0
        %v1170 = vsel %vm951, %v1154, 0.0
        %v1171 = vsel %vm952, %v1155, 0.0
        %v1172 = vsel %vm953, %v1156, 0.0
        %v1173 = vsel %vm954, %v1157, 0.0
        %v1174 = vsel %vm955, %v1158, 0.0
        %s1175 = sadd.s32 %s664, 32
        %s1176 = scalar_lea.vmem [#allocation2], %s1175
        %v1177 = vld [vmem:[%s1176] sm:$0xff]
        %v1178 = vld [vmem:[%s1176 + $0x8] sm:$0xff]
        %v1179 = vld [vmem:[%s1176 + $0x10] sm:$0xff]
        %v1180 = vld [vmem:[%s1176 + $0x18] sm:$0xff]
        %v1181 = vld [vmem:[%s1176 + $0x20] sm:$0xff]
        %v1182 = vld [vmem:[%s1176 + $0x28] sm:$0xff]
        %v1183 = vld [vmem:[%s1176 + $0x30] sm:$0xff]
        %v1184 = vld [vmem:[%s1176 + $0x38] sm:$0xff]
        %v1185 = vld [vmem:[%s1176 + $0x40] sm:$0xff]
        %v1186 = vld [vmem:[%s1176 + $0x48] sm:$0xff]
        %v1187 = vld [vmem:[%s1176 + $0x50] sm:$0xff]
        %v1188 = vld [vmem:[%s1176 + $0x58] sm:$0xff]
        %v1189 = vld [vmem:[%s1176 + $0x60] sm:$0xff]
        %v1190 = vld [vmem:[%s1176 + $0x68] sm:$0xff]
        %v1191 = vld [vmem:[%s1176 + $0x70] sm:$0xff]
        %v1192 = vld [vmem:[%s1176 + $0x78] sm:$0xff]
        %s1193 = sadd.s32 %s664, 33
        %s1194 = scalar_lea.vmem [#allocation2], %s1193
        %v1195 = vld [vmem:[%s1194] sm:$0xff]
        %v1196 = vld [vmem:[%s1194 + $0x8] sm:$0xff]
        %v1197 = vld [vmem:[%s1194 + $0x10] sm:$0xff]
        %v1198 = vld [vmem:[%s1194 + $0x18] sm:$0xff]
        %v1199 = vld [vmem:[%s1194 + $0x20] sm:$0xff]
        %v1200 = vld [vmem:[%s1194 + $0x28] sm:$0xff]
        %v1201 = vld [vmem:[%s1194 + $0x30] sm:$0xff]
        %v1202 = vld [vmem:[%s1194 + $0x38] sm:$0xff]
        %v1203 = vld [vmem:[%s1194 + $0x40] sm:$0xff]
        %v1204 = vld [vmem:[%s1194 + $0x48] sm:$0xff]
        %v1205 = vld [vmem:[%s1194 + $0x50] sm:$0xff]
        %v1206 = vld [vmem:[%s1194 + $0x58] sm:$0xff]
        %v1207 = vld [vmem:[%s1194 + $0x60] sm:$0xff]
        %v1208 = vld [vmem:[%s1194 + $0x68] sm:$0xff]
        %v1209 = vld [vmem:[%s1194 + $0x70] sm:$0xff]
        %v1210 = vld [vmem:[%s1194 + $0x78] sm:$0xff]
        %v1211 = vsel %vm1023, %v1195, 0.0
        %v1212 = vsel %vm1024, %v1196, 0.0
        %v1213 = vsel %vm1025, %v1197, 0.0
        %v1214 = vsel %vm1026, %v1198, 0.0
        %v1215 = vsel %vm1027, %v1199, 0.0
        %v1216 = vsel %vm1028, %v1200, 0.0
        %v1217 = vsel %vm1029, %v1201, 0.0
        %v1218 = vsel %vm1030, %v1202, 0.0
        %v1219 = vsel %vm1031, %v1203, 0.0
        %v1220 = vsel %vm1032, %v1204, 0.0
        %v1221 = vsel %vm1033, %v1205, 0.0
        %v1222 = vsel %vm1034, %v1206, 0.0
        %v1223 = vsel %vm1035, %v1207, 0.0
        %v1224 = vsel %vm1036, %v1208, 0.0
        %v1225 = vsel %vm1037, %v1209, 0.0
        %v1226 = vsel %vm1038, %v1210, 0.0
        %1243 = vrot.lane.b32.xlu0 %v973, 32
        %v1244 = vpop.permute.xlu0 %1243
        %1245 = vrot.lane.b32.xlu0 %v974, 32
        %v1246 = vpop.permute.xlu0 %1245
        %1247 = vrot.lane.b32.xlu0 %v975, 32
        %v1248 = vpop.permute.xlu0 %1247
        %1249 = vrot.lane.b32.xlu0 %v976, 32
        %v1250 = vpop.permute.xlu0 %1249
        %1251 = vrot.lane.b32.xlu0 %v977, 32
        %v1252 = vpop.permute.xlu0 %1251
        %1253 = vrot.lane.b32.xlu0 %v978, 32
        %v1254 = vpop.permute.xlu0 %1253
        %1255 = vrot.lane.b32.xlu0 %v979, 32
        %v1256 = vpop.permute.xlu0 %1255
        %1257 = vrot.lane.b32.xlu0 %v980, 32
        %v1258 = vpop.permute.xlu0 %1257
        %1259 = vrot.lane.b32.xlu0 %v981, 32
        %v1260 = vpop.permute.xlu0 %1259
        %1261 = vrot.lane.b32.xlu0 %v982, 32
        %v1262 = vpop.permute.xlu0 %1261
        %1263 = vrot.lane.b32.xlu0 %v983, 32
        %v1264 = vpop.permute.xlu0 %1263
        %1265 = vrot.lane.b32.xlu0 %v984, 32
        %v1266 = vpop.permute.xlu0 %1265
        %1267 = vrot.lane.b32.xlu0 %v985, 32
        %v1268 = vpop.permute.xlu0 %1267
        %1269 = vrot.lane.b32.xlu0 %v986, 32
        %v1270 = vpop.permute.xlu0 %1269
        %1271 = vrot.lane.b32.xlu0 %v987, 32
        %v1272 = vpop.permute.xlu0 %1271
        %1273 = vrot.lane.b32.xlu0 %v988, 32
        %v1274 = vpop.permute.xlu0 %1273
        %1307 = vrot.lane.b32.xlu0 %v1039, 64
        %v1308 = vpop.permute.xlu0 %1307
        %1309 = vrot.lane.b32.xlu0 %v1040, 64
        %v1310 = vpop.permute.xlu0 %1309
        %1311 = vrot.lane.b32.xlu0 %v1041, 64
        %v1312 = vpop.permute.xlu0 %1311
        %1313 = vrot.lane.b32.xlu0 %v1042, 64
        %v1314 = vpop.permute.xlu0 %1313
        %1315 = vrot.lane.b32.xlu0 %v1043, 64
        %v1316 = vpop.permute.xlu0 %1315
        %1317 = vrot.lane.b32.xlu0 %v1044, 64
        %v1318 = vpop.permute.xlu0 %1317
        %1319 = vrot.lane.b32.xlu0 %v1045, 64
        %v1320 = vpop.permute.xlu0 %1319
        %1321 = vrot.lane.b32.xlu0 %v1046, 64
        %v1322 = vpop.permute.xlu0 %1321
        %1323 = vrot.lane.b32.xlu0 %v1047, 64
        %v1324 = vpop.permute.xlu0 %1323
        %1325 = vrot.lane.b32.xlu0 %v1048, 64
        %v1326 = vpop.permute.xlu0 %1325
        %1327 = vrot.lane.b32.xlu0 %v1049, 64
        %v1328 = vpop.permute.xlu0 %1327
        %1329 = vrot.lane.b32.xlu0 %v1050, 64
        %v1330 = vpop.permute.xlu0 %1329
        %1331 = vrot.lane.b32.xlu0 %v1051, 64
        %v1332 = vpop.permute.xlu0 %1331
        %1333 = vrot.lane.b32.xlu0 %v1052, 64
        %v1334 = vpop.permute.xlu0 %1333
        %1335 = vrot.lane.b32.xlu0 %v1053, 64
        %v1336 = vpop.permute.xlu0 %1335
        %1337 = vrot.lane.b32.xlu0 %v1054, 64
        %v1338 = vpop.permute.xlu0 %1337
        %1371 = vrot.lane.b32.xlu0 %v1073, 96
        %v1372 = vpop.permute.xlu0 %1371
        %1373 = vrot.lane.b32.xlu0 %v1074, 96
        %v1374 = vpop.permute.xlu0 %1373
        %1375 = vrot.lane.b32.xlu0 %v1075, 96
        %v1376 = vpop.permute.xlu0 %1375
        %1377 = vrot.lane.b32.xlu0 %v1076, 96
        %v1378 = vpop.permute.xlu0 %1377
        %1379 = vrot.lane.b32.xlu0 %v1077, 96
        %v1380 = vpop.permute.xlu0 %1379
        %1381 = vrot.lane.b32.xlu0 %v1078, 96
        %v1382 = vpop.permute.xlu0 %1381
        %1383 = vrot.lane.b32.xlu0 %v1079, 96
        %v1384 = vpop.permute.xlu0 %1383
        %1385 = vrot.lane.b32.xlu0 %v1080, 96
        %v1386 = vpop.permute.xlu0 %1385
        %1387 = vrot.lane.b32.xlu0 %v1081, 96
        %v1388 = vpop.permute.xlu0 %1387
        %1389 = vrot.lane.b32.xlu0 %v1082, 96
        %v1390 = vpop.permute.xlu0 %1389
        %1391 = vrot.lane.b32.xlu0 %v1083, 96
        %v1392 = vpop.permute.xlu0 %1391
        %1393 = vrot.lane.b32.xlu0 %v1084, 96
        %v1394 = vpop.permute.xlu0 %1393
        %1395 = vrot.lane.b32.xlu0 %v1085, 96
        %v1396 = vpop.permute.xlu0 %1395
        %1397 = vrot.lane.b32.xlu0 %v1086, 96
        %v1398 = vpop.permute.xlu0 %1397
        %1399 = vrot.lane.b32.xlu0 %v1087, 96
        %v1400 = vpop.permute.xlu0 %1399
        %1401 = vrot.lane.b32.xlu0 %v1088, 96
        %v1402 = vpop.permute.xlu0 %1401
        %1435 = vrot.lane.b32.xlu0 %v1125, 32
        %v1436 = vpop.permute.xlu0 %1435
        %1437 = vrot.lane.b32.xlu0 %v1126, 32
        %v1438 = vpop.permute.xlu0 %1437
        %1439 = vrot.lane.b32.xlu0 %v1127, 32
        %v1440 = vpop.permute.xlu0 %1439
        %1441 = vrot.lane.b32.xlu0 %v1128, 32
        %v1442 = vpop.permute.xlu0 %1441
        %1443 = vrot.lane.b32.xlu0 %v1129, 32
        %v1444 = vpop.permute.xlu0 %1443
        %1445 = vrot.lane.b32.xlu0 %v1130, 32
        %v1446 = vpop.permute.xlu0 %1445
        %1447 = vrot.lane.b32.xlu0 %v1131, 32
        %v1448 = vpop.permute.xlu0 %1447
        %1449 = vrot.lane.b32.xlu0 %v1132, 32
        %v1450 = vpop.permute.xlu0 %1449
        %1451 = vrot.lane.b32.xlu0 %v1133, 32
        %v1452 = vpop.permute.xlu0 %1451
        %1453 = vrot.lane.b32.xlu0 %v1134, 32
        %v1454 = vpop.permute.xlu0 %1453
        %1455 = vrot.lane.b32.xlu0 %v1135, 32
        %v1456 = vpop.permute.xlu0 %1455
        %1457 = vrot.lane.b32.xlu0 %v1136, 32
        %v1458 = vpop.permute.xlu0 %1457
        %1459 = vrot.lane.b32.xlu0 %v1137, 32
        %v1460 = vpop.permute.xlu0 %1459
        %1461 = vrot.lane.b32.xlu0 %v1138, 32
        %v1462 = vpop.permute.xlu0 %1461
        %1463 = vrot.lane.b32.xlu0 %v1139, 32
        %v1464 = vpop.permute.xlu0 %1463
        %1465 = vrot.lane.b32.xlu0 %v1140, 32
        %v1466 = vpop.permute.xlu0 %1465
        %1499 = vrot.lane.b32.xlu0 %v1159, 64
        %v1500 = vpop.permute.xlu0 %1499
        %1501 = vrot.lane.b32.xlu0 %v1160, 64
        %v1502 = vpop.permute.xlu0 %1501
        %1503 = vrot.lane.b32.xlu0 %v1161, 64
        %v1504 = vpop.permute.xlu0 %1503
        %1505 = vrot.lane.b32.xlu0 %v1162, 64
        %v1506 = vpop.permute.xlu0 %1505
        %1507 = vrot.lane.b32.xlu0 %v1163, 64
        %v1508 = vpop.permute.xlu0 %1507
        %1509 = vrot.lane.b32.xlu0 %v1164, 64
        %v1510 = vpop.permute.xlu0 %1509
        %1511 = vrot.lane.b32.xlu0 %v1165, 64
        %v1512 = vpop.permute.xlu0 %1511
        %1513 = vrot.lane.b32.xlu0 %v1166, 64
        %v1514 = vpop.permute.xlu0 %1513
        %1515 = vrot.lane.b32.xlu0 %v1167, 64
        %v1516 = vpop.permute.xlu0 %1515
        %1517 = vrot.lane.b32.xlu0 %v1168, 64
        %v1518 = vpop.permute.xlu0 %1517
        %1519 = vrot.lane.b32.xlu0 %v1169, 64
        %v1520 = vpop.permute.xlu0 %1519
        %1521 = vrot.lane.b32.xlu0 %v1170, 64
        %v1522 = vpop.permute.xlu0 %1521
        %1523 = vrot.lane.b32.xlu0 %v1171, 64
        %v1524 = vpop.permute.xlu0 %1523
        %1525 = vrot.lane.b32.xlu0 %v1172, 64
        %v1526 = vpop.permute.xlu0 %1525
        %1527 = vrot.lane.b32.xlu0 %v1173, 64
        %v1528 = vpop.permute.xlu0 %1527
        %1529 = vrot.lane.b32.xlu0 %v1174, 64
        %v1530 = vpop.permute.xlu0 %1529
        %1563 = vrot.lane.b32.xlu0 %v1177, 96
        %v1564 = vpop.permute.xlu0 %1563
        %1565 = vrot.lane.b32.xlu0 %v1178, 96
        %v1566 = vpop.permute.xlu0 %1565
        %1567 = vrot.lane.b32.xlu0 %v1179, 96
        %v1568 = vpop.permute.xlu0 %1567
        %1569 = vrot.lane.b32.xlu0 %v1180, 96
        %v1570 = vpop.permute.xlu0 %1569
        %1571 = vrot.lane.b32.xlu0 %v1181, 96
        %v1572 = vpop.permute.xlu0 %1571
        %1573 = vrot.lane.b32.xlu0 %v1182, 96
        %v1574 = vpop.permute.xlu0 %1573
        %1575 = vrot.lane.b32.xlu0 %v1183, 96
        %v1576 = vpop.permute.xlu0 %1575
        %1577 = vrot.lane.b32.xlu0 %v1184, 96
        %v1578 = vpop.permute.xlu0 %1577
        %1579 = vrot.lane.b32.xlu0 %v1185, 96
        %v1580 = vpop.permute.xlu0 %1579
        %1581 = vrot.lane.b32.xlu0 %v1186, 96
        %v1582 = vpop.permute.xlu0 %1581
        %1583 = vrot.lane.b32.xlu0 %v1187, 96
        %v1584 = vpop.permute.xlu0 %1583
        %1585 = vrot.lane.b32.xlu0 %v1188, 96
        %v1586 = vpop.permute.xlu0 %1585
        %1587 = vrot.lane.b32.xlu0 %v1189, 96
        %v1588 = vpop.permute.xlu0 %1587
        %1589 = vrot.lane.b32.xlu0 %v1190, 96
        %v1590 = vpop.permute.xlu0 %1589
        %1591 = vrot.lane.b32.xlu0 %v1191, 96
        %v1592 = vpop.permute.xlu0 %1591
        %1593 = vrot.lane.b32.xlu0 %v1192, 96
        %v1594 = vpop.permute.xlu0 %1593
        %vm1611 = vcmask 261120
        %v1612 = vsel %vm1611, %v956, %v1244
        %v1613 = vsel %vm1611, %v957, %v1246
        %v1614 = vsel %vm1611, %v958, %v1248
        %v1615 = vsel %vm1611, %v959, %v1250
        %v1616 = vsel %vm1611, %v960, %v1252
        %v1617 = vsel %vm1611, %v961, %v1254
        %v1618 = vsel %vm1611, %v962, %v1256
        %v1619 = vsel %vm1611, %v963, %v1258
        %v1620 = vsel %vm1611, %v964, %v1260
        %v1621 = vsel %vm1611, %v965, %v1262
        %v1622 = vsel %vm1611, %v966, %v1264
        %v1623 = vsel %vm1611, %v967, %v1266
        %v1624 = vsel %vm1611, %v968, %v1268
        %v1625 = vsel %vm1611, %v969, %v1270
        %v1626 = vsel %vm1611, %v970, %v1272
        %v1627 = vsel %vm1611, %v971, %v1274
        %vm1628 = vcmask 523264
        %v1629 = vsel %vm1628, %v1612, %v1308
        %v1630 = vsel %vm1628, %v1613, %v1310
        %v1631 = vsel %vm1628, %v1614, %v1312
        %v1632 = vsel %vm1628, %v1615, %v1314
        %v1633 = vsel %vm1628, %v1616, %v1316
        %v1634 = vsel %vm1628, %v1617, %v1318
        %v1635 = vsel %vm1628, %v1618, %v1320
        %v1636 = vsel %vm1628, %v1619, %v1322
        %v1637 = vsel %vm1628, %v1620, %v1324
        %v1638 = vsel %vm1628, %v1621, %v1326
        %v1639 = vsel %vm1628, %v1622, %v1328
        %v1640 = vsel %vm1628, %v1623, %v1330
        %v1641 = vsel %vm1628, %v1624, %v1332
        %v1642 = vsel %vm1628, %v1625, %v1334
        %v1643 = vsel %vm1628, %v1626, %v1336
        %v1644 = vsel %vm1628, %v1627, %v1338
        %vm1645 = vcmask 785408
        %v1646 = vsel %vm1645, %v1629, %v1372
        %v1647 = vsel %vm1645, %v1630, %v1374
        %v1648 = vsel %vm1645, %v1631, %v1376
        %v1649 = vsel %vm1645, %v1632, %v1378
        %v1650 = vsel %vm1645, %v1633, %v1380
        %v1651 = vsel %vm1645, %v1634, %v1382
        %v1652 = vsel %vm1645, %v1635, %v1384
        %v1653 = vsel %vm1645, %v1636, %v1386
        %v1654 = vsel %vm1645, %v1637, %v1388
        %v1655 = vsel %vm1645, %v1638, %v1390
        %v1656 = vsel %vm1645, %v1639, %v1392
        %v1657 = vsel %vm1645, %v1640, %v1394
        %v1658 = vsel %vm1645, %v1641, %v1396
        %v1659 = vsel %vm1645, %v1642, %v1398
        %v1660 = vsel %vm1645, %v1643, %v1400
        %v1661 = vsel %vm1645, %v1644, %v1402
        %v1662 = vsel %vm1611, %v1091, %v1436
        %v1663 = vsel %vm1611, %v1092, %v1438
        %v1664 = vsel %vm1611, %v1093, %v1440
        %v1665 = vsel %vm1611, %v1094, %v1442
        %v1666 = vsel %vm1611, %v1095, %v1444
        %v1667 = vsel %vm1611, %v1096, %v1446
        %v1668 = vsel %vm1611, %v1097, %v1448
        %v1669 = vsel %vm1611, %v1098, %v1450
        %v1670 = vsel %vm1611, %v1099, %v1452
        %v1671 = vsel %vm1611, %v1100, %v1454
        %v1672 = vsel %vm1611, %v1101, %v1456
        %v1673 = vsel %vm1611, %v1102, %v1458
        %v1674 = vsel %vm1611, %v1103, %v1460
        %v1675 = vsel %vm1611, %v1104, %v1462
        %v1676 = vsel %vm1611, %v1105, %v1464
        %v1677 = vsel %vm1611, %v1106, %v1466
        %v1678 = vsel %vm1628, %v1662, %v1500
        %v1679 = vsel %vm1628, %v1663, %v1502
        %v1680 = vsel %vm1628, %v1664, %v1504
        %v1681 = vsel %vm1628, %v1665, %v1506
        %v1682 = vsel %vm1628, %v1666, %v1508
        %v1683 = vsel %vm1628, %v1667, %v1510
        %v1684 = vsel %vm1628, %v1668, %v1512
        %v1685 = vsel %vm1628, %v1669, %v1514
        %v1686 = vsel %vm1628, %v1670, %v1516
        %v1687 = vsel %vm1628, %v1671, %v1518
        %v1688 = vsel %vm1628, %v1672, %v1520
        %v1689 = vsel %vm1628, %v1673, %v1522
        %v1690 = vsel %vm1628, %v1674, %v1524
        %v1691 = vsel %vm1628, %v1675, %v1526
        %v1692 = vsel %vm1628, %v1676, %v1528
        %v1693 = vsel %vm1628, %v1677, %v1530
        %v1694 = vsel %vm1645, %v1678, %v1564
        %v1695 = vsel %vm1645, %v1679, %v1566
        %v1696 = vsel %vm1645, %v1680, %v1568
        %v1697 = vsel %vm1645, %v1681, %v1570
        %v1698 = vsel %vm1645, %v1682, %v1572
        %v1699 = vsel %vm1645, %v1683, %v1574
        %v1700 = vsel %vm1645, %v1684, %v1576
        %v1701 = vsel %vm1645, %v1685, %v1578
        %v1702 = vsel %vm1645, %v1686, %v1580
        %v1703 = vsel %vm1645, %v1687, %v1582
        %v1704 = vsel %vm1645, %v1688, %v1584
        %v1705 = vsel %vm1645, %v1689, %v1586
        %v1706 = vsel %vm1645, %v1690, %v1588
        %v1707 = vsel %vm1645, %v1691, %v1590
        %v1708 = vsel %vm1645, %v1692, %v1592
        %v1709 = vsel %vm1645, %v1693, %v1594
        %v1710 = vpack.c.bf16 %v1647, %v1646
        %v1711 = vpack.c.bf16 %v1695, %v1694
        %v1712 = vpack.c.bf16 %v1212, %v1211
        %v1713 = vpack.c.bf16 %v1649, %v1648
        %v1714 = vpack.c.bf16 %v1697, %v1696
        %v1715 = vpack.c.bf16 %v1214, %v1213
        %v1716 = vpack.c.bf16 %v1651, %v1650
        %v1717 = vpack.c.bf16 %v1699, %v1698
        %v1718 = vpack.c.bf16 %v1216, %v1215
        %v1719 = vpack.c.bf16 %v1653, %v1652
        %v1720 = vpack.c.bf16 %v1701, %v1700
        %v1721 = vpack.c.bf16 %v1218, %v1217
        %v1722 = vpack.c.bf16 %v1655, %v1654
        %v1723 = vpack.c.bf16 %v1703, %v1702
        %v1724 = vpack.c.bf16 %v1220, %v1219
        %v1725 = vpack.c.bf16 %v1657, %v1656
        %v1726 = vpack.c.bf16 %v1705, %v1704
        %v1727 = vpack.c.bf16 %v1222, %v1221
        %v1728 = vpack.c.bf16 %v1659, %v1658
        %v1729 = vpack.c.bf16 %v1707, %v1706
        %v1730 = vpack.c.bf16 %v1224, %v1223
        %v1731 = vpack.c.bf16 %v1661, %v1660
        %v1732 = vpack.c.bf16 %v1709, %v1708
        %v1733 = vpack.c.bf16 %v1226, %v1225
        %v1734 = vld [vmem:[%s3] sm:$0xf]
        %v1735 = vld [vmem:[%s3 + $0x4] sm:$0xf]
        %v1736 = vld [vmem:[%s3 + $0x8] sm:$0xf]
        %v1737 = vld [vmem:[%s3 + $0xc] sm:$0xf]
        %v1738 = vld [vmem:[%s3 + $0x10] sm:$0xf]
        %v1739 = vld [vmem:[%s3 + $0x14] sm:$0xf]
        %v1740 = vld [vmem:[%s3 + $0x18] sm:$0xf]
        %v1741 = vld [vmem:[%s3 + $0x1c] sm:$0xf]
        %v1742 = vld [vmem:[%s3 + $0x20] sm:$0xf]
        %v1743 = vld [vmem:[%s3 + $0x24] sm:$0xf]
        %v1744 = vld [vmem:[%s3 + $0x28] sm:$0xf]
        %v1745 = vld [vmem:[%s3 + $0x2c] sm:$0xf]
        %v1746 = vld [vmem:[%s3 + $0x30] sm:$0xf]
        %v1747 = vld [vmem:[%s3 + $0x34] sm:$0xf]
        %v1748 = vld [vmem:[%s3 + $0x38] sm:$0xf]
        %v1749 = vld [vmem:[%s3 + $0x3c] sm:$0xf]
        %v1750 = vld [vmem:[%s3 + $0x40] sm:$0xf]
        %v1751 = vld [vmem:[%s3 + $0x44] sm:$0xf]
        %v1752 = vld [vmem:[%s3 + $0x48] sm:$0xf]
        %v1753 = vld [vmem:[%s3 + $0x4c] sm:$0xf]
        %v1754 = vld [vmem:[%s3 + $0x50] sm:$0xf]
        %v1755 = vld [vmem:[%s3 + $0x54] sm:$0xf]
        %v1756 = vld [vmem:[%s3 + $0x58] sm:$0xf]
        %v1757 = vld [vmem:[%s3 + $0x5c] sm:$0xf]
        %v1758 = vld [vmem:[%s3 + $0x60] sm:$0xf]
        %v1759 = vld [vmem:[%s3 + $0x64] sm:$0xf]
        %v1760 = vld [vmem:[%s3 + $0x68] sm:$0xf]
        %v1761 = vld [vmem:[%s3 + $0x6c] sm:$0xf]
        %v1762 = vld [vmem:[%s3 + $0x70] sm:$0xf]
        %v1763 = vld [vmem:[%s3 + $0x74] sm:$0xf]
        %v1764 = vld [vmem:[%s3 + $0x78] sm:$0xf]
        %v1765 = vld [vmem:[%s3 + $0x7c] sm:$0xf]
        %v1766 = vld [vmem:[%s3 + $0x80] sm:$0xf]
        %v1767 = vld [vmem:[%s3 + $0x84] sm:$0xf]
        %v1768 = vld [vmem:[%s3 + $0x88] sm:$0xf]
        %v1769 = vld [vmem:[%s3 + $0x8c] sm:$0xf]
        %v1770 = vld [vmem:[%s4] sm:$0x1]
        %v1772 = vlaneseq
        %v1773 = vshrl.u32 %v1772, 7
        %v1774 = vsub.s32 0, %v1773
        %v1775 = vrot.slane %v1770, %v1774
        %v1813 = vunpack.c.l.b16 %v1734
        %v1814 = vunpack.c.l.b16 %v1735
        %v1815 = vunpack.c.l.b16 %v1736
        %v1816 = vunpack.c.l.b16 %v1737
        %v1817 = vunpack.c.l.b16 %v1738
        %v1818 = vunpack.c.l.b16 %v1739
        %v1819 = vunpack.c.l.b16 %v1740
        %v1820 = vunpack.c.l.b16 %v1741
        %v1821 = vunpack.c.l.b16 %v1742
        %v1822 = vunpack.c.l.b16 %v1743
        %v1823 = vunpack.c.l.b16 %v1744
        %v1824 = vunpack.c.l.b16 %v1745
        %v1825 = vunpack.c.l.b16 %v1746
        %v1826 = vunpack.c.l.b16 %v1747
        %v1827 = vunpack.c.l.b16 %v1748
        %v1828 = vunpack.c.l.b16 %v1749
        %v1829 = vunpack.c.l.b16 %v1750
        %v1830 = vunpack.c.l.b16 %v1751
        %v1831 = vunpack.c.l.b16 %v1752
        %v1832 = vunpack.c.l.b16 %v1753
        %v1833 = vunpack.c.l.b16 %v1754
        %v1834 = vunpack.c.l.b16 %v1755
        %v1835 = vunpack.c.l.b16 %v1756
        %v1836 = vunpack.c.l.b16 %v1757
        %v1837 = vunpack.c.l.b16 %v1758
        %v1838 = vunpack.c.l.b16 %v1759
        %v1839 = vunpack.c.l.b16 %v1760
        %v1840 = vunpack.c.l.b16 %v1761
        %v1841 = vunpack.c.l.b16 %v1762
        %v1842 = vunpack.c.l.b16 %v1763
        %v1843 = vunpack.c.l.b16 %v1764
        %v1844 = vunpack.c.l.b16 %v1765
        %v1845 = vunpack.c.l.b16 %v1766
        %v1846 = vunpack.c.l.b16 %v1767
        %v1847 = vunpack.c.l.b16 %v1768
        %v1848 = vunpack.c.l.b16 %v1769
        %v1849 = vpack.c.b16 %v1814, %v1813
        %v1850 = vpack.c.b16 %v1816, %v1815
        %v1851 = vpack.c.b16 %v1818, %v1817
        %v1852 = vpack.c.b16 %v1820, %v1819
        %v1853 = vpack.c.b16 %v1822, %v1821
        %v1854 = vpack.c.b16 %v1824, %v1823
        %v1855 = vpack.c.b16 %v1826, %v1825
        %v1856 = vpack.c.b16 %v1828, %v1827
        %v1857 = vpack.c.b16 %v1830, %v1829
        %v1858 = vpack.c.b16 %v1832, %v1831
        %v1859 = vpack.c.b16 %v1834, %v1833
        %v1860 = vpack.c.b16 %v1836, %v1835
        %v1861 = vpack.c.b16 %v1838, %v1837
        %v1862 = vpack.c.b16 %v1840, %v1839
        %v1863 = vpack.c.b16 %v1842, %v1841
        %v1864 = vpack.c.b16 %v1844, %v1843
        %v1865 = vpack.c.b16 %v1846, %v1845
        %v1866 = vpack.c.b16 %v1848, %v1847
        %v1886 = vsel %vm1611, %v1712, 0
        %v1889 = vsel %vm1611, %v1715, 0
        %v1892 = vsel %vm1611, %v1718, 0
        %v1895 = vsel %vm1611, %v1721, 0
        %v1898 = vsel %vm1611, %v1724, 0
        %v1901 = vsel %vm1611, %v1727, 0
        %v1904 = vsel %vm1611, %v1730, 0
        %v1907 = vsel %vm1611, %v1733, 0
        %1909 = vmatprep.subr.bf16.mxu0 0
        %1910 = vmatpush1.bf16.msra.mxu0 %v1849
        %1911 = vmatprep.subr.bf16.mxu0 0
        %1912 = vmatpush1.bf16.msra.mxu0 %v1850
        %1913 = vmatprep.subr.bf16.mxu0 0
        %1914 = vmatpush1.bf16.msra.mxu0 %v1851
        %1915 = vmatprep.subr.bf16.mxu0 0
        %1916 = vmatpush1.bf16.msra.mxu0 %v1852
        %1917 = vmatprep.subr.bf16.mxu0 0
        %1918 = vmatpush1.bf16.msra.mxu0 %v1853
        %1919 = vmatprep.subr.bf16.mxu0 0
        %1920 = vmatpush1.bf16.msra.mxu0 %v1854
        %1921 = vmatprep.subr.bf16.mxu0 0
        %1922 = vmatpush1.bf16.msra.mxu0 %v1855
        %1923 = vmatprep.subr.bf16.mxu0 0
        %1924 = vmatpush1.bf16.msra.mxu0 %v1856
        %1925 = vmatprep.subr.bf16.mxu0 0
        %1926 = vmatpush1.bf16.msra.mxu0 %v1857
        %1927 = vmatprep.subr.bf16.mxu0 0
        %1928 = vmatpush1.bf16.msra.mxu0 %v1858
        %1929 = vmatprep.subr.bf16.mxu0 0
        %1930 = vmatpush1.bf16.msra.mxu0 %v1859
        %1931 = vmatprep.subr.bf16.mxu0 0
        %1932 = vmatpush1.bf16.msra.mxu0 %v1860
        %1933 = vmatprep.subr.bf16.mxu0 0
        %1934 = vmatpush1.bf16.msra.mxu0 %v1861
        %1935 = vmatprep.subr.bf16.mxu0 0
        %1936 = vmatpush1.bf16.msra.mxu0 %v1862
        %1937 = vmatprep.subr.bf16.mxu0 0
        %1938 = vmatpush1.bf16.msra.mxu0 %v1863
        %1939 = vmatprep.subr.bf16.mxu0 0
        %1940 = vmatpush1.bf16.msra.mxu0 %v1864
        %1941 = vmatprep.mubr.bf16.mxu0 %v1711
        %1942 = vmatmul.mubr.bf16.gmra.mrb[0].mxu0 %v1710
        %v1943 = vpop.f32.mrb[0].mxu0
        %v1944 = vadd.f32 %v1775, %v1943
        %v1945 = vpop.f32.mrb[0].mxu0
        %v1946 = vpop.f32.mrb[0].mxu0
        %v1947 = vadd.f32 %v1775, %v1946
        %v1948 = vpop.f32.mrb[0].mxu0
        %1949 = vmatprep.mubr.bf16.mxu0 %v1714
        %1950 = vmatmul.mubr.bf16.gmra.mrb[0].mxu0 %v1713
        %v1951 = vpop.f32.mrb[0].mxu0
        %v1952 = vadd.f32 %v1775, %v1951
        %v1953 = vpop.f32.mrb[0].mxu0
        %v1954 = vpop.f32.mrb[0].mxu0
        %v1955 = vadd.f32 %v1775, %v1954
        %v1956 = vpop.f32.mrb[0].mxu0
        %1957 = vmatprep.mubr.bf16.mxu0 %v1717
        %1958 = vmatmul.mubr.bf16.gmra.mrb[0].mxu0 %v1716
        %v1959 = vpop.f32.mrb[0].mxu0
        %v1960 = vadd.f32 %v1775, %v1959
        %v1961 = vpop.f32.mrb[0].mxu0
        %v1962 = vpop.f32.mrb[0].mxu0
        %v1963 = vadd.f32 %v1775, %v1962
        %v1964 = vpop.f32.mrb[0].mxu0
        %1965 = vmatprep.mubr.bf16.mxu0 %v1720
        %1966 = vmatmul.mubr.bf16.gmra.mrb[0].mxu0 %v1719
        %v1967 = vpop.f32.mrb[0].mxu0
        %v1968 = vadd.f32 %v1775, %v1967
        %v1969 = vpop.f32.mrb[0].mxu0
        %v1970 = vpop.f32.mrb[0].mxu0
        %v1971 = vadd.f32 %v1775, %v1970
        %v1972 = vpop.f32.mrb[0].mxu0
        %1973 = vmatprep.mubr.bf16.mxu0 %v1723
        %1974 = vmatmul.mubr.bf16.gmra.mrb[0].mxu0 %v1722
        %v1975 = vpop.f32.mrb[0].mxu0
        %v1976 = vadd.f32 %v1775, %v1975
        %v1977 = vpop.f32.mrb[0].mxu0
        %v1978 = vpop.f32.mrb[0].mxu0
        %v1979 = vadd.f32 %v1775, %v1978
        %v1980 = vpop.f32.mrb[0].mxu0
        %1981 = vmatprep.mubr.bf16.mxu0 %v1726
        %1982 = vmatmul.mubr.bf16.gmra.mrb[0].mxu0 %v1725
        %v1983 = vpop.f32.mrb[0].mxu0
        %v1984 = vadd.f32 %v1775, %v1983
        %v1985 = vpop.f32.mrb[0].mxu0
        %v1986 = vpop.f32.mrb[0].mxu0
        %v1987 = vadd.f32 %v1775, %v1986
        %v1988 = vpop.f32.mrb[0].mxu0
        %1989 = vmatprep.mubr.bf16.mxu0 %v1729
        %1990 = vmatmul.mubr.bf16.gmra.mrb[0].mxu0 %v1728
        %v1991 = vpop.f32.mrb[0].mxu0
        %v1992 = vadd.f32 %v1775, %v1991
        %v1993 = vpop.f32.mrb[0].mxu0
        %v1994 = vpop.f32.mrb[0].mxu0
        %v1995 = vadd.f32 %v1775, %v1994
        %v1996 = vpop.f32.mrb[0].mxu0
        %1997 = vmatprep.mubr.bf16.mxu0 %v1732
        %1998 = vmatmul.mubr.bf16.gmra.mrb[0].mxu0 %v1731
        %v1999 = vpop.f32.mrb[0].mxu0
        %v2000 = vadd.f32 %v1775, %v1999
        %v2001 = vpop.f32.mrb[0].mxu0
        %v2002 = vpop.f32.mrb[0].mxu0
        %v2003 = vadd.f32 %v1775, %v2002
        %v2004 = vpop.f32.mrb[0].mxu0
        %2005 = vdwg.mxu0
        %2006 = vmatprep.subr.bf16.mxu0 0
        %2007 = vmatpush1.bf16.msra.mxu0 %v1865
        %2008 = vmatprep.subr.bf16.mxu0 0
        %2009 = vmatpush1.bf16.msra.mxu0 %v1866
        %2010 = vmatprep.subr.bf16.mxu0 0
        %2011 = vmatpush1.bf16.msra.mxu0 0
        %2012 = vmatprep.subr.bf16.mxu0 0
        %2013 = vmatpush1.bf16.msra.mxu0 0
        %2014 = vmatprep.subr.bf16.mxu0 0
        %2015 = vmatpush1.bf16.msra.mxu0 0
        %2016 = vmatprep.subr.bf16.mxu0 0
        %2017 = vmatpush1.bf16.msra.mxu0 0
        %2018 = vmatprep.subr.bf16.mxu0 0
        %2019 = vmatpush1.bf16.msra.mxu0 0
        %2020 = vmatprep.subr.bf16.mxu0 0
        %2021 = vmatpush1.bf16.msra.mxu0 0
        %2022 = vmatprep.subr.bf16.mxu0 0
        %2023 = vmatpush1.bf16.msra.mxu0 0
        %2024 = vmatprep.subr.bf16.mxu0 0
        %2025 = vmatpush1.bf16.msra.mxu0 0
        %2026 = vmatprep.subr.bf16.mxu0 0
        %2027 = vmatpush1.bf16.msra.mxu0 0
        %2028 = vmatprep.subr.bf16.mxu0 0
        %2029 = vmatpush1.bf16.msra.mxu0 0
        %2030 = vmatprep.subr.bf16.mxu0 0
        %2031 = vmatpush1.bf16.msra.mxu0 0
        %2032 = vmatprep.subr.bf16.mxu0 0
        %2033 = vmatpush1.bf16.msra.mxu0 0
        %2034 = vmatprep.subr.bf16.mxu0 0
        %2035 = vmatpush1.bf16.msra.mxu0 0
        %2036 = vmatprep.subr.bf16.mxu0 0
        %2037 = vmatpush1.bf16.msra.mxu0 0
        %2038 = vmatprep.mubr.bf16.mxu0 0
        %2039 = vmatmul.mubr.bf16.gmra.mrb[0].mxu0 %v1886
        %v2040 = vpop.f32.mrb[0].mxu0
        %v2041 = vadd.f32 %v1944, %v2040
        %v2042 = vpop.f32.mrb[0].mxu0
        %v2043 = vpop.f32.mrb[0].mxu0
        %v2044 = vadd.f32 %v1947, %v2043
        %v2045 = vpop.f32.mrb[0].mxu0
        %2046 = vmatprep.mubr.bf16.mxu0 0
        %2047 = vmatmul.mubr.bf16.gmra.mrb[0].mxu0 %v1889
        %v2048 = vpop.f32.mrb[0].mxu0
        %v2049 = vadd.f32 %v1952, %v2048
        %v2050 = vpop.f32.mrb[0].mxu0
        %v2051 = vpop.f32.mrb[0].mxu0
        %v2052 = vadd.f32 %v1955, %v2051
        %v2053 = vpop.f32.mrb[0].mxu0
        %2054 = vmatprep.mubr.bf16.mxu0 0
        %2055 = vmatmul.mubr.bf16.gmra.mrb[0].mxu0 %v1892
        %v2056 = vpop.f32.mrb[0].mxu0
        %v2057 = vadd.f32 %v1960, %v2056
        %v2058 = vpop.f32.mrb[0].mxu0
        %v2059 = vpop.f32.mrb[0].mxu0
        %v2060 = vadd.f32 %v1963, %v2059
        %v2061 = vpop.f32.mrb[0].mxu0
        %2062 = vmatprep.mubr.bf16.mxu0 0
        %2063 = vmatmul.mubr.bf16.gmra.mrb[0].mxu0 %v1895
        %v2064 = vpop.f32.mrb[0].mxu0
        %v2065 = vadd.f32 %v1968, %v2064
        %v2066 = vpop.f32.mrb[0].mxu0
        %v2067 = vpop.f32.mrb[0].mxu0
        %v2068 = vadd.f32 %v1971, %v2067
        %v2069 = vpop.f32.mrb[0].mxu0
        %2070 = vmatprep.mubr.bf16.mxu0 0
        %2071 = vmatmul.mubr.bf16.gmra.mrb[0].mxu0 %v1898
        %v2072 = vpop.f32.mrb[0].mxu0
        %v2073 = vadd.f32 %v1976, %v2072
        %v2074 = vpop.f32.mrb[0].mxu0
        %v2075 = vpop.f32.mrb[0].mxu0
        %v2076 = vadd.f32 %v1979, %v2075
        %v2077 = vpop.f32.mrb[0].mxu0
        %2078 = vmatprep.mubr.bf16.mxu0 0
        %2079 = vmatmul.mubr.bf16.gmra.mrb[0].mxu0 %v1901
        %v2080 = vpop.f32.mrb[0].mxu0
        %v2081 = vadd.f32 %v1984, %v2080
        %v2082 = vpop.f32.mrb[0].mxu0
        %v2083 = vpop.f32.mrb[0].mxu0
        %v2084 = vadd.f32 %v1987, %v2083
        %v2085 = vpop.f32.mrb[0].mxu0
        %2086 = vmatprep.mubr.bf16.mxu0 0
        %2087 = vmatmul.mubr.bf16.gmra.mrb[0].mxu0 %v1904
        %v2088 = vpop.f32.mrb[0].mxu0
        %v2089 = vadd.f32 %v1992, %v2088
        %v2090 = vpop.f32.mrb[0].mxu0
        %v2091 = vpop.f32.mrb[0].mxu0
        %v2092 = vadd.f32 %v1995, %v2091
        %v2093 = vpop.f32.mrb[0].mxu0
        %2094 = vmatprep.mubr.bf16.mxu0 0
        %2095 = vmatmul.mubr.bf16.gmra.mrb[0].mxu0 %v1907
        %v2096 = vpop.f32.mrb[0].mxu0
        %v2097 = vadd.f32 %v2000, %v2096
        %v2098 = vpop.f32.mrb[0].mxu0
        %v2099 = vpop.f32.mrb[0].mxu0
        %v2100 = vadd.f32 %v2003, %v2099
        %v2101 = vpop.f32.mrb[0].mxu0
        %2102 = vdwg.mxu0
        %v2103 = vmax.f32 %v2041, 0.0
        %v2104 = vmax.f32 %v2044, 0.0
        %v2105 = vmax.f32 %v2049, 0.0
        %v2106 = vmax.f32 %v2052, 0.0
        %v2107 = vmax.f32 %v2057, 0.0
        %v2108 = vmax.f32 %v2060, 0.0
        %v2109 = vmax.f32 %v2065, 0.0
        %v2110 = vmax.f32 %v2068, 0.0
        %v2111 = vmax.f32 %v2073, 0.0
        %v2112 = vmax.f32 %v2076, 0.0
        %v2113 = vmax.f32 %v2081, 0.0
        %v2114 = vmax.f32 %v2084, 0.0
        %v2115 = vmax.f32 %v2089, 0.0
        %v2116 = vmax.f32 %v2092, 0.0
        %v2117 = vmax.f32 %v2097, 0.0
        %v2118 = vmax.f32 %v2100, 0.0
        %s2119 = smul.u32 %s26, 8
        %s2120 = smul.u32 %s2119, 16
        %s2121 = scalar_lea.vmem %s290, %s2120
        %v2122 = vld [vmem:[%s2121] sm:$0xff]
        %v2123 = vld [vmem:[%s2121 + $0x8] sm:$0xff]
        %v2124 = vld [vmem:[%s2121 + $0x10] sm:$0xff]
        %v2125 = vld [vmem:[%s2121 + $0x18] sm:$0xff]
        %v2126 = vld [vmem:[%s2121 + $0x20] sm:$0xff]
        %v2127 = vld [vmem:[%s2121 + $0x28] sm:$0xff]
        %v2128 = vld [vmem:[%s2121 + $0x30] sm:$0xff]
        %v2129 = vld [vmem:[%s2121 + $0x38] sm:$0xff]
        %v2130 = vld [vmem:[%s2121 + $0x40] sm:$0xff]
        %v2131 = vld [vmem:[%s2121 + $0x48] sm:$0xff]
        %v2132 = vld [vmem:[%s2121 + $0x50] sm:$0xff]
        %v2133 = vld [vmem:[%s2121 + $0x58] sm:$0xff]
        %v2134 = vld [vmem:[%s2121 + $0x60] sm:$0xff]
        %v2135 = vld [vmem:[%s2121 + $0x68] sm:$0xff]
        %v2136 = vld [vmem:[%s2121 + $0x70] sm:$0xff]
        %v2137 = vld [vmem:[%s2121 + $0x78] sm:$0xff]
        %v2138 = vpack.c.bf16 %v2104, %v2103
        %v2139 = vpack.c.bf16 %v2106, %v2105
        %v2140 = vpack.c.bf16 %v2108, %v2107
        %v2141 = vpack.c.bf16 %v2110, %v2109
        %v2142 = vpack.c.bf16 %v2112, %v2111
        %v2143 = vpack.c.bf16 %v2114, %v2113
        %v2144 = vpack.c.bf16 %v2116, %v2115
        %v2145 = vpack.c.bf16 %v2118, %v2117
        %v2146 = vpack.c.bf16 %v2123, %v2122
        %v2147 = vpack.c.bf16 %v2125, %v2124
        %v2148 = vpack.c.bf16 %v2127, %v2126
        %v2149 = vpack.c.bf16 %v2129, %v2128
        %v2150 = vpack.c.bf16 %v2131, %v2130
        %v2151 = vpack.c.bf16 %v2133, %v2132
        %v2152 = vpack.c.bf16 %v2135, %v2134
        %v2153 = vpack.c.bf16 %v2137, %v2136
        %2162 = vrot.lane.b32.xlu0 %v2146, 32
        %v2163 = vpop.permute.xlu0 %2162
        %2164 = vrot.lane.b32.xlu0 %v2147, 32
        %v2165 = vpop.permute.xlu0 %2164
        %2166 = vrot.lane.b32.xlu0 %v2148, 32
        %v2167 = vpop.permute.xlu0 %2166
        %2168 = vrot.lane.b32.xlu0 %v2149, 32
        %v2169 = vpop.permute.xlu0 %2168
        %2170 = vrot.lane.b32.xlu0 %v2150, 32
        %v2171 = vpop.permute.xlu0 %2170
        %2172 = vrot.lane.b32.xlu0 %v2151, 32
        %v2173 = vpop.permute.xlu0 %2172
        %2174 = vrot.lane.b32.xlu0 %v2152, 32
        %v2175 = vpop.permute.xlu0 %2174
        %2176 = vrot.lane.b32.xlu0 %v2153, 32
        %v2177 = vpop.permute.xlu0 %2176
        %v2180 = vsel %vm1611, %v2138, %v2163
        %v2183 = vsel %vm1611, %v2139, %v2165
        %v2186 = vsel %vm1611, %v2140, %v2167
        %v2189 = vsel %vm1611, %v2141, %v2169
        %v2192 = vsel %vm1611, %v2142, %v2171
        %v2195 = vsel %vm1611, %v2143, %v2173
        %v2198 = vsel %vm1611, %v2144, %v2175
        %v2201 = vsel %vm1611, %v2145, %v2177
        %v2202 = vld [vmem:[%s5] sm:$0xf]
        %v2203 = vld [vmem:[%s5 + $0x4] sm:$0xf]
        %v2204 = vld [vmem:[%s5 + $0x8] sm:$0xf]
        %v2205 = vld [vmem:[%s5 + $0xc] sm:$0xf]
        %v2206 = vld [vmem:[%s5 + $0x10] sm:$0xf]
        %v2207 = vld [vmem:[%s5 + $0x14] sm:$0xf]
        %v2208 = vld [vmem:[%s5 + $0x18] sm:$0xf]
        %v2209 = vld [vmem:[%s5 + $0x1c] sm:$0xf]
        %v2210 = vld [vmem:[%s5 + $0x20] sm:$0xf]
        %v2211 = vld [vmem:[%s5 + $0x24] sm:$0xf]
        %v2212 = vld [vmem:[%s5 + $0x28] sm:$0xf]
        %v2213 = vld [vmem:[%s5 + $0x2c] sm:$0xf]
        %v2214 = vld [vmem:[%s6] sm:$0x1]
        %v2216 = vlaneseq
        %v2217 = vshrl.u32 %v2216, 7
        %v2218 = vsub.s32 0, %v2217
        %v2219 = vrot.slane %v2214, %v2218
        %v2233 = vunpack.c.l.b16 %v2202
        %v2234 = vunpack.c.l.b16 %v2203
        %v2235 = vunpack.c.l.b16 %v2204
        %v2236 = vunpack.c.l.b16 %v2205
        %v2237 = vunpack.c.l.b16 %v2206
        %v2238 = vunpack.c.l.b16 %v2207
        %v2239 = vunpack.c.l.b16 %v2208
        %v2240 = vunpack.c.l.b16 %v2209
        %v2241 = vunpack.c.l.b16 %v2210
        %v2242 = vunpack.c.l.b16 %v2211
        %v2243 = vunpack.c.l.b16 %v2212
        %v2244 = vunpack.c.l.b16 %v2213
        %v2245 = vpack.c.b16 %v2234, %v2233
        %v2246 = vpack.c.b16 %v2236, %v2235
        %v2247 = vpack.c.b16 %v2238, %v2237
        %v2248 = vpack.c.b16 %v2240, %v2239
        %v2249 = vpack.c.b16 %v2242, %v2241
        %v2250 = vpack.c.b16 %v2244, %v2243
        %v2257 = vsel %vm1645, %v2180, 0
        %v2259 = vsel %vm1645, %v2183, 0
        %v2261 = vsel %vm1645, %v2186, 0
        %v2263 = vsel %vm1645, %v2189, 0
        %v2265 = vsel %vm1645, %v2192, 0
        %v2267 = vsel %vm1645, %v2195, 0
        %v2269 = vsel %vm1645, %v2198, 0
        %v2271 = vsel %vm1645, %v2201, 0
        %2273 = vmatprep.subr.bf16.mxu0 0
        %2274 = vmatpush1.bf16.msra.mxu0 %v2245
        %2275 = vmatprep.subr.bf16.mxu0 0
        %2276 = vmatpush1.bf16.msra.mxu0 %v2246
        %2277 = vmatprep.subr.bf16.mxu0 0
        %2278 = vmatpush1.bf16.msra.mxu0 %v2247
        %2279 = vmatprep.subr.bf16.mxu0 0
        %2280 = vmatpush1.bf16.msra.mxu0 %v2248
        %2281 = vmatprep.subr.bf16.mxu0 0
        %2282 = vmatpush1.bf16.msra.mxu0 %v2249
        %2283 = vmatprep.subr.bf16.mxu0 0
        %2284 = vmatpush1.bf16.msra.mxu0 %v2250
        %2285 = vmatprep.subr.bf16.mxu0 0
        %2286 = vmatpush1.bf16.msra.mxu0 0
        %2287 = vmatprep.subr.bf16.mxu0 0
        %2288 = vmatpush1.bf16.msra.mxu0 0
        %2289 = vmatprep.subr.bf16.mxu0 0
        %2290 = vmatpush1.bf16.msra.mxu0 0
        %2291 = vmatprep.subr.bf16.mxu0 0
        %2292 = vmatpush1.bf16.msra.mxu0 0
        %2293 = vmatprep.subr.bf16.mxu0 0
        %2294 = vmatpush1.bf16.msra.mxu0 0
        %2295 = vmatprep.subr.bf16.mxu0 0
        %2296 = vmatpush1.bf16.msra.mxu0 0
        %2297 = vmatprep.subr.bf16.mxu0 0
        %2298 = vmatpush1.bf16.msra.mxu0 0
        %2299 = vmatprep.subr.bf16.mxu0 0
        %2300 = vmatpush1.bf16.msra.mxu0 0
        %2301 = vmatprep.subr.bf16.mxu0 0
        %2302 = vmatpush1.bf16.msra.mxu0 0
        %2303 = vmatprep.subr.bf16.mxu0 0
        %2304 = vmatpush1.bf16.msra.mxu0 0
        %2305 = vmatprep.mubr.bf16.mxu0 0
        %2306 = vmatmul.mubr.bf16.gmra.mrb[0].mxu0 %v2257
        %v2307 = vpop.f32.mrb[0].mxu0
        %v2308 = vadd.f32 %v2219, %v2307
        %v2309 = vpop.f32.mrb[0].mxu0
        %v2310 = vpop.f32.mrb[0].mxu0
        %v2311 = vadd.f32 %v2219, %v2310
        %v2312 = vpop.f32.mrb[0].mxu0
        %2313 = vmatprep.mubr.bf16.mxu0 0
        %2314 = vmatmul.mubr.bf16.gmra.mrb[0].mxu0 %v2259
        %v2315 = vpop.f32.mrb[0].mxu0
        %v2316 = vadd.f32 %v2219, %v2315
        %v2317 = vpop.f32.mrb[0].mxu0
        %v2318 = vpop.f32.mrb[0].mxu0
        %v2319 = vadd.f32 %v2219, %v2318
        %v2320 = vpop.f32.mrb[0].mxu0
        %2321 = vmatprep.mubr.bf16.mxu0 0
        %2322 = vmatmul.mubr.bf16.gmra.mrb[0].mxu0 %v2261
        %v2323 = vpop.f32.mrb[0].mxu0
        %v2324 = vadd.f32 %v2219, %v2323
        %v2325 = vpop.f32.mrb[0].mxu0
        %v2326 = vpop.f32.mrb[0].mxu0
        %v2327 = vadd.f32 %v2219, %v2326
        %v2328 = vpop.f32.mrb[0].mxu0
        %2329 = vmatprep.mubr.bf16.mxu0 0
        %2330 = vmatmul.mubr.bf16.gmra.mrb[0].mxu0 %v2263
        %v2331 = vpop.f32.mrb[0].mxu0
        %v2332 = vadd.f32 %v2219, %v2331
        %v2333 = vpop.f32.mrb[0].mxu0
        %v2334 = vpop.f32.mrb[0].mxu0
        %v2335 = vadd.f32 %v2219, %v2334
        %v2336 = vpop.f32.mrb[0].mxu0
        %2337 = vmatprep.mubr.bf16.mxu0 0
        %2338 = vmatmul.mubr.bf16.gmra.mrb[0].mxu0 %v2265
        %v2339 = vpop.f32.mrb[0].mxu0
        %v2340 = vadd.f32 %v2219, %v2339
        %v2341 = vpop.f32.mrb[0].mxu0
        %v2342 = vpop.f32.mrb[0].mxu0
        %v2343 = vadd.f32 %v2219, %v2342
        %v2344 = vpop.f32.mrb[0].mxu0
        %2345 = vmatprep.mubr.bf16.mxu0 0
        %2346 = vmatmul.mubr.bf16.gmra.mrb[0].mxu0 %v2267
        %v2347 = vpop.f32.mrb[0].mxu0
        %v2348 = vadd.f32 %v2219, %v2347
        %v2349 = vpop.f32.mrb[0].mxu0
        %v2350 = vpop.f32.mrb[0].mxu0
        %v2351 = vadd.f32 %v2219, %v2350
        %v2352 = vpop.f32.mrb[0].mxu0
        %2353 = vmatprep.mubr.bf16.mxu0 0
        %2354 = vmatmul.mubr.bf16.gmra.mrb[0].mxu0 %v2269
        %v2355 = vpop.f32.mrb[0].mxu0
        %v2356 = vadd.f32 %v2219, %v2355
        %v2357 = vpop.f32.mrb[0].mxu0
        %v2358 = vpop.f32.mrb[0].mxu0
        %v2359 = vadd.f32 %v2219, %v2358
        %v2360 = vpop.f32.mrb[0].mxu0
        %2361 = vmatprep.mubr.bf16.mxu0 0
        %2362 = vmatmul.mubr.bf16.gmra.mrb[0].mxu0 %v2271
        %v2363 = vpop.f32.mrb[0].mxu0
        %v2364 = vadd.f32 %v2219, %v2363
        %v2365 = vpop.f32.mrb[0].mxu0
        %v2366 = vpop.f32.mrb[0].mxu0
        %v2367 = vadd.f32 %v2219, %v2366
        %v2368 = vpop.f32.mrb[0].mxu0
        %2369 = vdwg.mxu0
        %v2370 = vmax.f32 %v2308, 0.0
        %v2371 = vmax.f32 %v2311, 0.0
        %v2372 = vmax.f32 %v2316, 0.0
        %v2373 = vmax.f32 %v2319, 0.0
        %v2374 = vmax.f32 %v2324, 0.0
        %v2375 = vmax.f32 %v2327, 0.0
        %v2376 = vmax.f32 %v2332, 0.0
        %v2377 = vmax.f32 %v2335, 0.0
        %v2378 = vmax.f32 %v2340, 0.0
        %v2379 = vmax.f32 %v2343, 0.0
        %v2380 = vmax.f32 %v2348, 0.0
        %v2381 = vmax.f32 %v2351, 0.0
        %v2382 = vmax.f32 %v2356, 0.0
        %v2383 = vmax.f32 %v2359, 0.0
        %v2384 = vmax.f32 %v2364, 0.0
        %v2385 = vmax.f32 %v2367, 0.0
        %2386 = vst [vmem:[%s285] sm:$0xff] %v2370
        %2387 = vst [vmem:[%s285 + $0x8] sm:$0xff] %v2371
        %2388 = vst [vmem:[%s285 + $0x10] sm:$0xff] %v2372
        %2389 = vst [vmem:[%s285 + $0x18] sm:$0xff] %v2373
        %2390 = vst [vmem:[%s285 + $0x20] sm:$0xff] %v2374
        %2391 = vst [vmem:[%s285 + $0x28] sm:$0xff] %v2375
        %2392 = vst [vmem:[%s285 + $0x30] sm:$0xff] %v2376
        %2393 = vst [vmem:[%s285 + $0x38] sm:$0xff] %v2377
        %2394 = vst [vmem:[%s285 + $0x40] sm:$0xff] %v2378
        %2395 = vst [vmem:[%s285 + $0x48] sm:$0xff] %v2379
        %2396 = vst [vmem:[%s285 + $0x50] sm:$0xff] %v2380
        %2397 = vst [vmem:[%s285 + $0x58] sm:$0xff] %v2381
        %2398 = vst [vmem:[%s285 + $0x60] sm:$0xff] %v2382
        %2399 = vst [vmem:[%s285 + $0x68] sm:$0xff] %v2383
        %2400 = vst [vmem:[%s285 + $0x70] sm:$0xff] %v2384
        %2401 = vst [vmem:[%s285 + $0x78] sm:$0xff] %v2385
        %s2402 = sand.u32 %s195, 1
        %s2403 = scalar_lea.sflag [#allocation4], %s2402
        %s2404 = sand.u32 %s195, 1
        %s2405 = smul.addr %s2404, 128
        %s2406 = scalar_lea.vmem [#allocation3], %s2405
        // Predicated region
        $region53: #{bottleneck_forward.1} parent=47 // pred_check
          %p2407 = pneg %p205
        $region54: #{bottleneck_forward.1} parent=47 // pred_check_branch
          %2409 = sbr.rel (%p2407) target = $region56
        $region55: #{bottleneck_forward.1} parent=47 // pred_region
          %s2410 = smul.u32 8, %s26
          %s2412 = ssub.s32 2048, 2048
          %2413 = vsyncadd %s2403, %s2412
          %s2414 = smul.addr %s2410, 2
          %s2415 = smul.addr %s25, 32
          %s2416 = sadd.s32 %s2414, %s2415
          %s2417 = smul.addr %s2416, 128
          %s2418 = scalar_lea.hbm %s7, %s2417
          %s2419 = sshll.u32 %s2406, 4
          %s2420 = int_to_ptr.vmem [resolvable:$true] %s2419
          %2425 = dma.vmem_to_hbm [thread:$0]  %s2420, 2048, %s2418, %s2403, 128, 128, 8
        $region56: #{bottleneck_forward.1} parent=47 // pred_fallthru
          _
      $region48: #{bottleneck_forward.1} parent=5 // pred_fallthru
        _
      %p2426 = scmp.le.s32.totalorder 2, %s16
      // Predicated region
      $region57: #{bottleneck_forward.1} parent=5 // pred_check
        %p2427 = pneg %p2426
      $region58: #{bottleneck_forward.1} parent=5 // pred_check_branch
        %2429 = sbr.rel (%p2427) target = $region60
      $region59: #{bottleneck_forward.1} parent=5 // pred_region
        %s2430 = ssub.s32 %s16, 2
        // Predicated region
        $region61: #{bottleneck_forward.1} parent=59 // pred_check
          %p2431 = pneg %p211
        $region62: #{bottleneck_forward.1} parent=59 // pred_check_branch
          %2433 = sbr.rel (%p2431) target = $region64
        $region63: #{bottleneck_forward.1} parent=59 // pred_region
          %s2434 = sand.u32 %s196, 1
          %s2435 = scalar_lea.sflag [#allocation4], %s2434
          %s2436 = sand.u32 %s196, 1
          %s2437 = smul.addr %s2436, 128
          %s2438 = scalar_lea.vmem [#allocation3], %s2437
          %2439 = dma.done %s2435, 2048
        $region64: #{bottleneck_forward.1} parent=59 // pred_fallthru
          _
      $region60: #{bottleneck_forward.1} parent=5 // pred_fallthru
        _
    $region6: #{bottleneck_forward.1} parent=1 // loop_footer
      %s20 = sadd.s32 1, %s16
    $region7: #{bottleneck_forward.1} parent=1 // loop_footer_branch
      %15 = sbr.rel target = $region3
    $region8: #{bottleneck_forward.1} parent=1 // loop_exit
      _
    %2440 = vsyncpa [#allocation4], 1
    %s2441 = scalar_lea.sflag [#allocation4], 1
    %2442 = vsyncpa %s2441, 1

</llo_original>
